<compile_context>
chip_gen: v7x
topology: tpu7x:2x2x1
jax: 0.10.0
libtpu: 0.0.40
codegen_flags: <defaults>
</compile_context>

<pallas_src>
import functools
import math

import jax
import jax.numpy as jnp
from jax.experimental import pallas as pl
from jax.experimental.pallas import tpu as pltpu


def _inverted_residual_kernel(
    x_ref, w1_ref, b1_ref, wdw_ref, b2_ref, w2_ref, b3_ref,
    o_ref, pad_ref,
    *, H, W, Cin, hidden, oup, stride, use_res, use_conv1,
):
    x = x_ref[0]  # (H, W, Cin)

    # ---- 1x1 expand conv (BN scale pre-folded into w1) + shift + ReLU6 ----
    # bf16 operands on the MXU, f32 accumulation.
    if use_conv1:
        h = jnp.dot(
            x.reshape(H * W, Cin).astype(jnp.bfloat16),
            w1_ref[...],
            preferred_element_type=jnp.float32,
        )
        h = jnp.clip(h + b1_ref[...], 0.0, 6.0)
    else:
        # use_conv1=False requires hidden == Cin (asserted in the wrapper).
        h = x.reshape(H * W, Cin).astype(jnp.float32)

    # ---- depthwise 3x3 (padding=1, stride in {1,2}) + shift + ReLU6 -------
    # Only the 1-pixel border of the padded scratch needs zeros: the interior
    # is fully overwritten every grid step.  Border zeroing is done every step
    # (not only at program_id==0) because the scratch is per-TensorCore under
    # dimension_semantics="parallel".
    zrow = jnp.zeros((1, W + 2, hidden), jnp.float32)
    zcol = jnp.zeros((H, 1, hidden), jnp.float32)
    pad_ref[0:1, :, :] = zrow
    pad_ref[H + 1:H + 2, :, :] = zrow
    pad_ref[1:H + 1, 0:1, :] = zcol
    pad_ref[1:H + 1, W + 1:W + 2, :] = zcol
    pad_ref[1:H + 1, 1:W + 1, :] = h.reshape(H, W, hidden)

    Hout = (H + 2 - 3) // stride + 1
    Wout = (W + 2 - 3) // stride + 1

    wdw = wdw_ref[...]  # (9, hidden), BN scale pre-folded; hoisted out of loop
    acc = jnp.zeros((Hout, Wout, hidden), jnp.float32)
    for kh in range(3):
        for kw in range(3):
            if stride == 1:
                win = pad_ref[kh:kh + Hout, kw:kw + Wout, :]
            else:
                # TODO(synk): for stride=2, a one-time even/odd column
                # deinterleave of pad_ref would replace these 9 sublane-strided
                # reads with contiguous ones.
                win = pad_ref[pl.ds(kh, Hout, stride=stride),
                              pl.ds(kw, Wout, stride=stride), :]
            kt = kh * 3 + kw
            acc = acc + win * wdw[kt:kt + 1].reshape(1, 1, hidden)

    h2 = jnp.clip(acc.reshape(Hout * Wout, hidden) + b2_ref[...], 0.0, 6.0)

    # ---- 1x1 project conv (BN scale pre-folded into w2) + shift ------------
    y = jnp.dot(h2.astype(jnp.bfloat16), w2_ref[...],
                preferred_element_type=jnp.float32)
    y = (y + b3_ref[...]).reshape(Hout, Wout, oup)

    # ---- residual -----------------------------------------------------------
    if use_res:
        y = y + x.astype(jnp.float32)

    o_ref[0] = y.astype(o_ref.dtype)


def _padded_vmem_bytes(shape, dtype):
    """Rough VMEM footprint of one buffer, accounting for (sublane, lane) tiling."""
    itemsize = jnp.dtype(dtype).itemsize
    if len(shape) == 0:
        return itemsize
    dims = list(shape)
    dims[-1] = -(-dims[-1] // 128) * 128
    if len(dims) >= 2:
        sub = 8 * max(1, 4 // itemsize)
        dims[-2] = -(-dims[-2] // sub) * sub
    return math.prod(dims) * itemsize


def inverted_residual(x, params, *, stride, use_conv1=True):
    """x: (N, H, W, Cin) float32, NHWC. Returns (N, Hout, Wout, oup)."""
    w1, s1, b1, wdw, s2, b2, w2, s3, b3 = params
    N, H, W, Cin = x.shape
    hidden, oup = w2.shape
    Hout = (H + 2 - 3) // stride + 1
    Wout = (W + 2 - 3) // stride + 1
    use_res = (stride == 1) and (Cin == oup)
    if not use_conv1:
        assert hidden == Cin, "use_conv1=False requires hidden_dim == inp"

    # Fold the (inference-mode) BN scales into the conv weights; only the
    # per-channel shifts are applied in-kernel.  1x1 conv weights go to bf16
    # (native MXU dtype, halves weight DMA/VMEM); depthwise weights and shifts
    # stay f32 (VPU path, correct on v5e which has no bf16 VALU).
    w1f = (w1 * s1).astype(jnp.bfloat16)
    w2f = (w2 * s3).astype(jnp.bfloat16)
    wdwf = (wdw * s2).astype(jnp.float32)
    b1f = b1.astype(jnp.float32)
    b2f = b2.astype(jnp.float32)
    b3f = b3.astype(jnp.float32)
    weight_args = (w1f, b1f, wdwf, b2f, w2f, b3f)

    kernel = functools.partial(
        _inverted_residual_kernel,
        H=H, W=W, Cin=Cin, hidden=hidden, oup=oup,
        stride=stride, use_res=use_res, use_conv1=use_conv1,
    )

    def full_spec(shape):
        return pl.BlockSpec(shape, lambda n, _s=len(shape): (0,) * _s)

    grid_spec = pltpu.PrefetchScalarGridSpec(
        num_scalar_prefetch=0,
        grid=(N,),
        in_specs=[pl.BlockSpec((1, H, W, Cin), lambda n: (n, 0, 0, 0))]
                + [full_spec(a.shape) for a in weight_args],
        out_specs=pl.BlockSpec((1, Hout, Wout, oup), lambda n: (n, 0, 0, 0)),
        scratch_shapes=[pltpu.VMEM((H + 2, W + 2, hidden), jnp.float32)],
    )

    # Explicit VMEM budget (v7x has 64 MiB physical; default scoped limit is
    # only 16/32 MiB): double-buffered x/out blocks + weights + padded scratch
    # + in-kernel temporaries, 2x headroom, clamped to [32, 48] MiB.
    est = (
        2 * _padded_vmem_bytes((1, H, W, Cin), x.dtype)
        + 2 * _padded_vmem_bytes((1, Hout, Wout, oup), x.dtype)
        + 2 * sum(_padded_vmem_bytes(a.shape, a.dtype) for a in weight_args)
        + _padded_vmem_bytes((H + 2, W + 2, hidden), jnp.float32)      # pad scratch
        + _padded_vmem_bytes((H * W, hidden), jnp.float32)             # h
        + 2 * _padded_vmem_bytes((Hout * Wout, hidden), jnp.float32)   # acc, h2
        + _padded_vmem_bytes((Hout * Wout, oup), jnp.float32)          # y
    )
    vmem_limit = int(min(max(2 * est + (4 << 20), 32 << 20), 48 << 20))

    # TODO(synk): for real MobileNetV2 early-layer shapes (e.g. 112x112), add a
    # spatial row-strip grid axis with a 1-row halo so VMEM stays bounded on
    # v7x and the pipeline gets enough grid steps to overlap DMA; also consider
    # a lane-dense (Hout, Wout*oup) output slab when oup < 128.
    return pl.pallas_call(
        kernel,
        out_shape=jax.ShapeDtypeStruct((N, Hout, Wout, oup), x.dtype),
        grid_spec=grid_spec,
        compiler_params=pltpu.CompilerParams(
            dimension_semantics=("parallel",),
            vmem_limit_bytes=vmem_limit),
    )(x, *weight_args)


def init_params(key, inp, oup, hidden, eps=1e-5):
    """Deterministic synthetic parameters (BatchNorm folded, inference mode)."""
    ks = jax.random.split(key, 15)

    def bn_fold(kg, kb, km, kv, c):
        gamma = 1.0 + 0.1 * jax.random.normal(kg, (c,), jnp.float32)
        beta = 0.1 * jax.random.normal(kb, (c,), jnp.float32)
        mean = 0.1 * jax.random.normal(km, (c,), jnp.float32)
        var = jnp.abs(jax.random.normal(kv, (c,), jnp.float32)) + 0.5
        scale = gamma / jnp.sqrt(var + eps)
        shift = beta - mean * scale
        return scale.reshape(1, c), shift.reshape(1, c)

    # torch Conv2d(inp, hidden, 1) weight (hidden, inp, 1, 1) -> (inp, hidden)
    w1 = 0.1 * jax.random.normal(ks[0], (inp, hidden), jnp.float32)
    s1, b1 = bn_fold(ks[1], ks[2], ks[3], ks[4], hidden)
    # torch depthwise Conv2d(hidden, hidden, 3, groups=hidden) weight
    # (hidden, 1, 3, 3) -> (9, hidden)
    wdw = 0.1 * jax.random.normal(ks[5], (9, hidden), jnp.float32)
    s2, b2 = bn_fold(ks[6], ks[7], ks[8], ks[9], hidden)
    # torch Conv2d(hidden, oup, 1) weight (oup, hidden, 1, 1) -> (hidden, oup)
    w2 = 0.1 * jax.random.normal(ks[10], (hidden, oup), jnp.float32)
    s3, b3 = bn_fold(ks[11], ks[12], ks[13], ks[14], oup)
    return (w1, s1, b1, wdw, s2, b2, w2, s3, b3)


def reference(x, params, stride, use_conv1=True, mxu_bf16=False):
    """Plain-JAX reference of the same (inference-mode) forward pass.

    mxu_bf16=True mirrors the kernel's bf16 MXU inputs (f32 accumulation).
    """
    w1, s1, b1, wdw, s2, b2, w2, s3, b3 = params
    N, H, W, Cin = x.shape
    hidden, oup = w2.shape
    Hout = (H + 2 - 3) // stride + 1
    Wout = (W + 2 - 3) // stride + 1
    hi = jax.lax.Precision.HIGHEST

    def q(a):
        return a.astype(jnp.bfloat16).astype(jnp.float32) if mxu_bf16 else a

    if use_conv1:
        h = jnp.einsum('nhwc,cd->nhwd', q(x), q(w1 * s1), precision=hi)
        h = jnp.clip(h + b1.reshape(1, 1, 1, -1), 0.0, 6.0)
    else:
        h = x
    hp = jnp.pad(h, ((0, 0), (1, 1), (1, 1), (0, 0)))
    wdwf = wdw * s2
    acc = jnp.zeros((N, Hout, Wout, hidden), jnp.float32)
    for kh in range(3):
        for kw in range(3):
            win = hp[:, kh:kh + (Hout - 1) * stride + 1:stride,
                     kw:kw + (Wout - 1) * stride + 1:stride, :]
            acc = acc + win * wdwf[kh * 3 + kw].reshape(1, 1, 1, -1)
    h2 = jnp.clip(acc + b2.reshape(1, 1, 1, -1), 0.0, 6.0)
    y = jnp.einsum('nhwc,cd->nhwd', q(h2), q(w2 * s3), precision=hi)
    y = y + b3.reshape(1, 1, 1, -1)
    if stride == 1 and Cin == oup:
        y = y + x
    return y


if __name__ == "__main__":
    key = jax.random.PRNGKey(0)

    # (inp, oup, hidden, stride, use_conv1): small MobileNetV2-style blocks.
    cases = [
        (8, 8, 16, 1, True),     # expand + residual (stride=1, inp==oup)
        (8, 16, 32, 2, True),    # expand + downsample (stride=2)
        (16, 8, 16, 1, False),   # expand_ratio == 1 (no 1x1 expand conv)
    ]
    N, H, W = 2, 16, 16

    for inp, oup, hidden, stride, use_conv1 in cases:
        key, kx, kp = jax.random.split(key, 3)
        x = jax.random.normal(kx, (N, H, W, inp), jnp.float32)  # NHWC
        params = init_params(kp, inp, oup, hidden)

        out = inverted_residual(x, params, stride=stride, use_conv1=use_conv1)
        out = jax.block_until_ready(out)

        ref_bf16 = reference(x, params, stride, use_conv1=use_conv1, mxu_bf16=True)
        ref_f32 = reference(x, params, stride, use_conv1=use_conv1, mxu_bf16=False)
        assert out.shape == ref_bf16.shape, (out.shape, ref_bf16.shape)
        # Tight check vs a bf16-matmul-aware reference (structural correctness).
        assert jnp.allclose(out, ref_bf16, atol=2e-3, rtol=2e-3), (
            float(jnp.max(jnp.abs(out - ref_bf16))))
        # Loose check vs the pure-f32 reference (bounded bf16 precision loss).
        assert jnp.allclose(out, ref_f32, atol=1e-1, rtol=1e-1), (
            float(jnp.max(jnp.abs(out - ref_f32))))

    print("KERNEL_OK")
</pallas_src>

<mosaic_0001>
module attributes {stable_mosaic.version = 11 : i64} {
  func.func @_inverted_residual_kernel(%arg0: i32, %arg1: memref<1x16x16x8xf32, #tpu.memory_space<vmem>>, %arg2: memref<8x16xbf16, #tpu.memory_space<vmem>>, %arg3: memref<1x16xf32, #tpu.memory_space<vmem>>, %arg4: memref<9x16xf32, #tpu.memory_space<vmem>>, %arg5: memref<1x16xf32, #tpu.memory_space<vmem>>, %arg6: memref<16x8xbf16, #tpu.memory_space<vmem>>, %arg7: memref<1x8xf32, #tpu.memory_space<vmem>>, %arg8: memref<1x16x16x8xf32, #tpu.memory_space<vmem>>, %arg9: memref<18x18x16xf32, #tpu.memory_space<vmem>>) attributes {dimension_semantics = [#tpu.dimension_semantics<parallel>], iteration_bounds = array<i64: 2>, scalar_prefetch = 0 : i64, scratch_operands = 1 : i64, tpu.core_type = #tpu.core_type<tc>, window_params = [{transform_indices = @transform_0, window_bounds = array<i64: 1, 16, 16, 8>}, {pipeline_mode = #tpu.pipeline_mode<synchronous>, transform_indices = @transform_1, window_bounds = array<i64: 8, 16>}, {pipeline_mode = #tpu.pipeline_mode<synchronous>, transform_indices = @transform_2, window_bounds = array<i64: 1, 16>}, {pipeline_mode = #tpu.pipeline_mode<synchronous>, transform_indices = @transform_3, window_bounds = array<i64: 9, 16>}, {pipeline_mode = #tpu.pipeline_mode<synchronous>, transform_indices = @transform_4, window_bounds = array<i64: 1, 16>}, {pipeline_mode = #tpu.pipeline_mode<synchronous>, transform_indices = @transform_5, window_bounds = array<i64: 16, 8>}, {pipeline_mode = #tpu.pipeline_mode<synchronous>, transform_indices = @transform_6, window_bounds = array<i64: 1, 8>}, {transform_indices = @transform_7, window_bounds = array<i64: 1, 16, 16, 8>}]} {
    %c0 = arith.constant 0 : index
    %c0_0 = arith.constant 0 : index
    %c0_1 = arith.constant 0 : index
    %c0_2 = arith.constant 0 : index
    %0 = vector.load %arg1[%c0, %c0_0, %c0_1, %c0_2] : memref<1x16x16x8xf32, #tpu.memory_space<vmem>>, vector<1x16x16x8xf32>
    %1 = vector.shape_cast %0 : vector<1x16x16x8xf32> to vector<16x16x8xf32>
    %2 = vector.shape_cast %1 : vector<16x16x8xf32> to vector<256x8xf32>
    %3 = arith.truncf %2 : vector<256x8xf32> to vector<256x8xbf16>
    %c0_3 = arith.constant 0 : index
    %c0_4 = arith.constant 0 : index
    %4 = vector.load %arg2[%c0_3, %c0_4] : memref<8x16xbf16, #tpu.memory_space<vmem>>, vector<8x16xbf16>
    %cst = arith.constant dense<0.000000e+00> : vector<256x16xf32>
    %5 = tpu.matmul %3, %4, %cst {dimension_numbers = #tpu.dot_dimension_numbers<[1], [0], [0], [1], [0, 0, 1, 1], [], []>} : vector<256x8xbf16>, vector<8x16xbf16>, vector<256x16xf32> -> vector<256x16xf32>
    %c0_5 = arith.constant 0 : index
    %c0_6 = arith.constant 0 : index
    %6 = vector.load %arg3[%c0_5, %c0_6] : memref<1x16xf32, #tpu.memory_space<vmem>>, vector<1x16xf32>
    %7 = vector.broadcast %6 : vector<1x16xf32> to vector<256x16xf32>
    %8 = arith.addf %5, %7 : vector<256x16xf32>
    %cst_7 = arith.constant 0.000000e+00 : f32
    %cst_8 = arith.constant 6.000000e+00 : f32
    %9 = vector.broadcast %cst_7 : f32 to vector<256x16xf32>
    %10 = arith.maximumf %9, %8 : vector<256x16xf32>
    %11 = vector.broadcast %cst_8 : f32 to vector<256x16xf32>
    %12 = arith.minimumf %11, %10 : vector<256x16xf32>
    %cst_9 = arith.constant 0.000000e+00 : f32
    %13 = vector.broadcast %cst_9 : f32 to vector<1x18x16xf32>
    %cst_10 = arith.constant 0.000000e+00 : f32
    %14 = vector.broadcast %cst_10 : f32 to vector<16x1x16xf32>
    %c0_11 = arith.constant 0 : index
    %c0_12 = arith.constant 0 : index
    %c0_13 = arith.constant 0 : index
    %15 = vector.load %arg9[%c0_11, %c0_12, %c0_13] : memref<18x18x16xf32, #tpu.memory_space<vmem>>, vector<1x18x16xf32>
    tpu.vector_store %arg9[%c0_11, %c0_12, %c0_13], %13 {strides = array<i32>} : memref<18x18x16xf32, #tpu.memory_space<vmem>>, vector<1x18x16xf32>,
    %c17 = arith.constant 17 : index
    %c0_14 = arith.constant 0 : index
    %c0_15 = arith.constant 0 : index
    %16 = vector.load %arg9[%c17, %c0_14, %c0_15] : memref<18x18x16xf32, #tpu.memory_space<vmem>>, vector<1x18x16xf32>
    tpu.vector_store %arg9[%c17, %c0_14, %c0_15], %13 {strides = array<i32>} : memref<18x18x16xf32, #tpu.memory_space<vmem>>, vector<1x18x16xf32>,
    %c1 = arith.constant 1 : index
    %c0_16 = arith.constant 0 : index
    %c0_17 = arith.constant 0 : index
    %17 = vector.load %arg9[%c1, %c0_16, %c0_17] : memref<18x18x16xf32, #tpu.memory_space<vmem>>, vector<16x1x16xf32>
    tpu.vector_store %arg9[%c1, %c0_16, %c0_17], %14 {strides = array<i32>} : memref<18x18x16xf32, #tpu.memory_space<vmem>>, vector<16x1x16xf32>,
    %c1_18 = arith.constant 1 : index
    %c17_19 = arith.constant 17 : index
    %c0_20 = arith.constant 0 : index
    %18 = vector.load %arg9[%c1_18, %c17_19, %c0_20] : memref<18x18x16xf32, #tpu.memory_space<vmem>>, vector<16x1x16xf32>
    tpu.vector_store %arg9[%c1_18, %c17_19, %c0_20], %14 {strides = array<i32>} : memref<18x18x16xf32, #tpu.memory_space<vmem>>, vector<16x1x16xf32>,
    %19 = vector.shape_cast %12 : vector<256x16xf32> to vector<16x16x16xf32>
    %c1_21 = arith.constant 1 : index
    %c1_22 = arith.constant 1 : index
    %c0_23 = arith.constant 0 : index
    %20 = vector.load %arg9[%c1_21, %c1_22, %c0_23] : memref<18x18x16xf32, #tpu.memory_space<vmem>>, vector<16x16x16xf32>
    tpu.vector_store %arg9[%c1_21, %c1_22, %c0_23], %19 {strides = array<i32>} : memref<18x18x16xf32, #tpu.memory_space<vmem>>, vector<16x16x16xf32>,
    %c0_24 = arith.constant 0 : index
    %c0_25 = arith.constant 0 : index
    %21 = vector.load %arg4[%c0_24, %c0_25] : memref<9x16xf32, #tpu.memory_space<vmem>>, vector<9x16xf32>
    %cst_26 = arith.constant 0.000000e+00 : f32
    %22 = vector.broadcast %cst_26 : f32 to vector<16x16x16xf32>
    %c0_27 = arith.constant 0 : index
    %c0_28 = arith.constant 0 : index
    %c0_29 = arith.constant 0 : index
    %23 = vector.load %arg9[%c0_27, %c0_28, %c0_29] : memref<18x18x16xf32, #tpu.memory_space<vmem>>, vector<16x16x16xf32>
    %24 = vector.extract_strided_slice %21 {offsets = [0, 0], sizes = [1, 16], strides = [1, 1]} : vector<9x16xf32> to vector<1x16xf32>
    %25 = vector.shape_cast %24 : vector<1x16xf32> to vector<1x1x16xf32>
    %26 = vector.broadcast %25 : vector<1x1x16xf32> to vector<16x16x16xf32>
    %27 = arith.mulf %23, %26 : vector<16x16x16xf32>
    %28 = arith.addf %22, %27 : vector<16x16x16xf32>
    %c0_30 = arith.constant 0 : index
    %c1_31 = arith.constant 1 : index
    %c0_32 = arith.constant 0 : index
    %29 = vector.load %arg9[%c0_30, %c1_31, %c0_32] : memref<18x18x16xf32, #tpu.memory_space<vmem>>, vector<16x16x16xf32>
    %30 = vector.extract_strided_slice %21 {offsets = [1, 0], sizes = [1, 16], strides = [1, 1]} : vector<9x16xf32> to vector<1x16xf32>
    %31 = vector.shape_cast %30 : vector<1x16xf32> to vector<1x1x16xf32>
    %32 = vector.broadcast %31 : vector<1x1x16xf32> to vector<16x16x16xf32>
    %33 = arith.mulf %29, %32 : vector<16x16x16xf32>
    %34 = arith.addf %28, %33 : vector<16x16x16xf32>
    %c0_33 = arith.constant 0 : index
    %c2 = arith.constant 2 : index
    %c0_34 = arith.constant 0 : index
    %35 = vector.load %arg9[%c0_33, %c2, %c0_34] : memref<18x18x16xf32, #tpu.memory_space<vmem>>, vector<16x16x16xf32>
    %36 = vector.extract_strided_slice %21 {offsets = [2, 0], sizes = [1, 16], strides = [1, 1]} : vector<9x16xf32> to vector<1x16xf32>
    %37 = vector.shape_cast %36 : vector<1x16xf32> to vector<1x1x16xf32>
    %38 = vector.broadcast %37 : vector<1x1x16xf32> to vector<16x16x16xf32>
    %39 = arith.mulf %35, %38 : vector<16x16x16xf32>
    %40 = arith.addf %34, %39 : vector<16x16x16xf32>
    %c1_35 = arith.constant 1 : index
    %c0_36 = arith.constant 0 : index
    %c0_37 = arith.constant 0 : index
    %41 = vector.load %arg9[%c1_35, %c0_36, %c0_37] : memref<18x18x16xf32, #tpu.memory_space<vmem>>, vector<16x16x16xf32>
    %42 = vector.extract_strided_slice %21 {offsets = [3, 0], sizes = [1, 16], strides = [1, 1]} : vector<9x16xf32> to vector<1x16xf32>
    %43 = vector.shape_cast %42 : vector<1x16xf32> to vector<1x1x16xf32>
    %44 = vector.broadcast %43 : vector<1x1x16xf32> to vector<16x16x16xf32>
    %45 = arith.mulf %41, %44 : vector<16x16x16xf32>
    %46 = arith.addf %40, %45 : vector<16x16x16xf32>
    %c1_38 = arith.constant 1 : index
    %c1_39 = arith.constant 1 : index
    %c0_40 = arith.constant 0 : index
    %47 = vector.load %arg9[%c1_38, %c1_39, %c0_40] : memref<18x18x16xf32, #tpu.memory_space<vmem>>, vector<16x16x16xf32>
    %48 = vector.extract_strided_slice %21 {offsets = [4, 0], sizes = [1, 16], strides = [1, 1]} : vector<9x16xf32> to vector<1x16xf32>
    %49 = vector.shape_cast %48 : vector<1x16xf32> to vector<1x1x16xf32>
    %50 = vector.broadcast %49 : vector<1x1x16xf32> to vector<16x16x16xf32>
    %51 = arith.mulf %47, %50 : vector<16x16x16xf32>
    %52 = arith.addf %46, %51 : vector<16x16x16xf32>
    %c1_41 = arith.constant 1 : index
    %c2_42 = arith.constant 2 : index
    %c0_43 = arith.constant 0 : index
    %53 = vector.load %arg9[%c1_41, %c2_42, %c0_43] : memref<18x18x16xf32, #tpu.memory_space<vmem>>, vector<16x16x16xf32>
    %54 = vector.extract_strided_slice %21 {offsets = [5, 0], sizes = [1, 16], strides = [1, 1]} : vector<9x16xf32> to vector<1x16xf32>
    %55 = vector.shape_cast %54 : vector<1x16xf32> to vector<1x1x16xf32>
    %56 = vector.broadcast %55 : vector<1x1x16xf32> to vector<16x16x16xf32>
    %57 = arith.mulf %53, %56 : vector<16x16x16xf32>
    %58 = arith.addf %52, %57 : vector<16x16x16xf32>
    %c2_44 = arith.constant 2 : index
    %c0_45 = arith.constant 0 : index
    %c0_46 = arith.constant 0 : index
    %59 = vector.load %arg9[%c2_44, %c0_45, %c0_46] : memref<18x18x16xf32, #tpu.memory_space<vmem>>, vector<16x16x16xf32>
    %60 = vector.extract_strided_slice %21 {offsets = [6, 0], sizes = [1, 16], strides = [1, 1]} : vector<9x16xf32> to vector<1x16xf32>
    %61 = vector.shape_cast %60 : vector<1x16xf32> to vector<1x1x16xf32>
    %62 = vector.broadcast %61 : vector<1x1x16xf32> to vector<16x16x16xf32>
    %63 = arith.mulf %59, %62 : vector<16x16x16xf32>
    %64 = arith.addf %58, %63 : vector<16x16x16xf32>
    %c2_47 = arith.constant 2 : index
    %c1_48 = arith.constant 1 : index
    %c0_49 = arith.constant 0 : index
    %65 = vector.load %arg9[%c2_47, %c1_48, %c0_49] : memref<18x18x16xf32, #tpu.memory_space<vmem>>, vector<16x16x16xf32>
    %66 = vector.extract_strided_slice %21 {offsets = [7, 0], sizes = [1, 16], strides = [1, 1]} : vector<9x16xf32> to vector<1x16xf32>
    %67 = vector.shape_cast %66 : vector<1x16xf32> to vector<1x1x16xf32>
    %68 = vector.broadcast %67 : vector<1x1x16xf32> to vector<16x16x16xf32>
    %69 = arith.mulf %65, %68 : vector<16x16x16xf32>
    %70 = arith.addf %64, %69 : vector<16x16x16xf32>
    %c2_50 = arith.constant 2 : index
    %c2_51 = arith.constant 2 : index
    %c0_52 = arith.constant 0 : index
    %71 = vector.load %arg9[%c2_50, %c2_51, %c0_52] : memref<18x18x16xf32, #tpu.memory_space<vmem>>, vector<16x16x16xf32>
    %72 = vector.extract_strided_slice %21 {offsets = [8, 0], sizes = [1, 16], strides = [1, 1]} : vector<9x16xf32> to vector<1x16xf32>
    %73 = vector.shape_cast %72 : vector<1x16xf32> to vector<1x1x16xf32>
    %74 = vector.broadcast %73 : vector<1x1x16xf32> to vector<16x16x16xf32>
    %75 = arith.mulf %71, %74 : vector<16x16x16xf32>
    %76 = arith.addf %70, %75 : vector<16x16x16xf32>
    %77 = vector.shape_cast %76 : vector<16x16x16xf32> to vector<256x16xf32>
    %c0_53 = arith.constant 0 : index
    %c0_54 = arith.constant 0 : index
    %78 = vector.load %arg5[%c0_53, %c0_54] : memref<1x16xf32, #tpu.memory_space<vmem>>, vector<1x16xf32>
    %79 = vector.broadcast %78 : vector<1x16xf32> to vector<256x16xf32>
    %80 = arith.addf %77, %79 : vector<256x16xf32>
    %cst_55 = arith.constant 0.000000e+00 : f32
    %cst_56 = arith.constant 6.000000e+00 : f32
    %81 = vector.broadcast %cst_55 : f32 to vector<256x16xf32>
    %82 = arith.maximumf %81, %80 : vector<256x16xf32>
    %83 = vector.broadcast %cst_56 : f32 to vector<256x16xf32>
    %84 = arith.minimumf %83, %82 : vector<256x16xf32>
    %85 = arith.truncf %84 : vector<256x16xf32> to vector<256x16xbf16>
    %c0_57 = arith.constant 0 : index
    %c0_58 = arith.constant 0 : index
    %86 = vector.load %arg6[%c0_57, %c0_58] : memref<16x8xbf16, #tpu.memory_space<vmem>>, vector<16x8xbf16>
    %cst_59 = arith.constant dense<0.000000e+00> : vector<256x8xf32>
    %87 = tpu.matmul %85, %86, %cst_59 {dimension_numbers = #tpu.dot_dimension_numbers<[1], [0], [0], [1], [0, 0, 1, 1], [], []>} : vector<256x16xbf16>, vector<16x8xbf16>, vector<256x8xf32> -> vector<256x8xf32>
    %c0_60 = arith.constant 0 : index
    %c0_61 = arith.constant 0 : index
    %88 = vector.load %arg7[%c0_60, %c0_61] : memref<1x8xf32, #tpu.memory_space<vmem>>, vector<1x8xf32>
    %89 = vector.broadcast %88 : vector<1x8xf32> to vector<256x8xf32>
    %90 = arith.addf %87, %89 : vector<256x8xf32>
    %91 = vector.shape_cast %90 : vector<256x8xf32> to vector<16x16x8xf32>
    %92 = arith.addf %91, %1 : vector<16x16x8xf32>
    %c0_62 = arith.constant 0 : index
    %c0_63 = arith.constant 0 : index
    %c0_64 = arith.constant 0 : index
    %c0_65 = arith.constant 0 : index
    %93 = vector.load %arg8[%c0_62, %c0_63, %c0_64, %c0_65] : memref<1x16x16x8xf32, #tpu.memory_space<vmem>>, vector<1x16x16x8xf32>
    %94 = vector.shape_cast %93 : vector<1x16x16x8xf32> to vector<16x16x8xf32>
    %95 = vector.shape_cast %92 : vector<16x16x8xf32> to vector<1x16x16x8xf32>
    tpu.vector_store %arg8[%c0_62, %c0_63, %c0_64, %c0_65], %95 {strides = array<i32>} : memref<1x16x16x8xf32, #tpu.memory_space<vmem>>, vector<1x16x16x8xf32>,
    return
  }
  func.func @transform_0(%arg0: i32) -> (i32, i32, i32, i32) {
    %c0_i32 = arith.constant 0 : i32
    %c0_i32_0 = arith.constant 0 : i32
    %c0_i32_1 = arith.constant 0 : i32
    %c0_i32_2 = arith.constant 0 : i32
    return %arg0, %c0_i32, %c0_i32_0, %c0_i32_1 : i32, i32, i32, i32
  }
  func.func @transform_1(%arg0: i32) -> (i32, i32) {
    %c0_i32 = arith.constant 0 : i32
    %c0_i32_0 = arith.constant 0 : i32
    %c0_i32_1 = arith.constant 0 : i32
    return %c0_i32, %c0_i32_0 : i32, i32
  }
  func.func @transform_2(%arg0: i32) -> (i32, i32) {
    %c0_i32 = arith.constant 0 : i32
    %c0_i32_0 = arith.constant 0 : i32
    %c0_i32_1 = arith.constant 0 : i32
    return %c0_i32, %c0_i32_0 : i32, i32
  }
  func.func @transform_3(%arg0: i32) -> (i32, i32) {
    %c0_i32 = arith.constant 0 : i32
    %c0_i32_0 = arith.constant 0 : i32
    %c0_i32_1 = arith.constant 0 : i32
    return %c0_i32, %c0_i32_0 : i32, i32
  }
  func.func @transform_4(%arg0: i32) -> (i32, i32) {
    %c0_i32 = arith.constant 0 : i32
    %c0_i32_0 = arith.constant 0 : i32
    %c0_i32_1 = arith.constant 0 : i32
    return %c0_i32, %c0_i32_0 : i32, i32
  }
  func.func @transform_5(%arg0: i32) -> (i32, i32) {
    %c0_i32 = arith.constant 0 : i32
    %c0_i32_0 = arith.constant 0 : i32
    %c0_i32_1 = arith.constant 0 : i32
    return %c0_i32, %c0_i32_0 : i32, i32
  }
  func.func @transform_6(%arg0: i32) -> (i32, i32) {
    %c0_i32 = arith.constant 0 : i32
    %c0_i32_0 = arith.constant 0 : i32
    %c0_i32_1 = arith.constant 0 : i32
    return %c0_i32, %c0_i32_0 : i32, i32
  }
  func.func @transform_7(%arg0: i32) -> (i32, i32, i32, i32) {
    %c0_i32 = arith.constant 0 : i32
    %c0_i32_0 = arith.constant 0 : i32
    %c0_i32_1 = arith.constant 0 : i32
    %c0_i32_2 = arith.constant 0 : i32
    return %arg0, %c0_i32, %c0_i32_0, %c0_i32_1 : i32, i32, i32, i32
  }
}

</mosaic_0001>

<llo_original>
// kernel: tpu_custom_call.1
$region0: #{tpu_custom_call.1}
  #allocation0 [shape = 'u32[]', space=smem, size = 0x4, offset = 0x4, fixed_abs, tag = 'smem constant byte address 0x4 - core index']
  #allocation1 [shape = 'u32[144,128]{1,0:T(1,128)}', space=vmem, size = 0x12000, scoped, tag = 'internal scratch']
  #allocation2 [shape = 'f32[18,18,16]{2,1,0:T(8,128)}', space=vmem, size = 0x36000, scoped, tag = 'scratch operand']
  %s0 = inlined_call_operand.vmem [shape: f32[2,16,16,8], index: 0, kind: input, shape index: {}]
  %s1 = inlined_call_operand.vmem [shape: bf16[8,16], index: 1, kind: input, shape index: {}]
  %s2 = inlined_call_operand.vmem [shape: f32[1,16], index: 2, kind: input, shape index: {}]
  %s3 = inlined_call_operand.vmem [shape: f32[9,16], index: 3, kind: input, shape index: {}]
  %s4 = inlined_call_operand.vmem [shape: f32[1,16], index: 4, kind: input, shape index: {}]
  %s5 = inlined_call_operand.vmem [shape: bf16[16,8], index: 5, kind: input, shape index: {}]
  %s6 = inlined_call_operand.vmem [shape: f32[1,8], index: 6, kind: input, shape index: {}]
  %s7 = inlined_call_operand.vmem [shape: f32[2,16,16,8], index: 7, kind: output, shape index: {}]
  %s8 = sld [smem:[#allocation0]]
  $region61: #{tpu_custom_call.1} parent=0
    _
  %s10 = ssub.s32 1, %s8
  %s11 = scalar_select 0, %s10, %s8
  loop: start=0, step=1, limit=4
  $region2: #{tpu_custom_call.1} parent=0 // loop_pre_header
    _
  $region3: #{tpu_custom_call.1} parent=0 // loop_header
    %s13 = sphi 0, %s17
    %p14 = scmp.ge.s32.totalorder %s13, 4
    %s23 = sphi 0, %s25
    %s26 = sphi 0, %s23
    %s27 = sphi 0, %s26
    %s43 = sphi 0, %s27
    %s47 = sphi 0, %s47
    %s49 = sphi 0, %s47
    %s50 = sphi 0, %s49
    %s64 = sphi 0, %s50
    %s68 = sphi 0, %s68
    %s70 = sphi 0, %s68
    %s71 = sphi 0, %s70
    %s85 = sphi 0, %s71
    %s89 = sphi 0, %s89
    %s91 = sphi 0, %s89
    %s92 = sphi 0, %s91
    %s106 = sphi 0, %s92
    %s110 = sphi 0, %s110
    %s112 = sphi 0, %s110
    %s113 = sphi 0, %s112
    %s127 = sphi 0, %s113
    %s131 = sphi 0, %s131
    %s133 = sphi 0, %s131
    %s134 = sphi 0, %s133
    %s148 = sphi 0, %s134
    %s152 = sphi 0, %s152
    %s154 = sphi 0, %s152
    %s155 = sphi 0, %s154
    %s169 = sphi 0, %s155
    %s175 = sphi 0, %s177
    %s178 = sphi 0, %s175
    %s179 = sphi 0, %s178
    %s195 = sphi 0, %s179
  $region4: #{tpu_custom_call.1} parent=0 // loop_header_branch
    %16 = sbr.rel (%p14) target = $region8
  $region5: #{tpu_custom_call.1} parent=0 // loop_body
    %s18 = ssub.s32 %s13, 1
    %s19 = ssub.s32 %s13, 2
    %s20 = sadd.s32 %s13, 1
    %s21 = ssub.s32 %s13, %s20
    %p22 = scmp.eq.s32.totalorder %s21, 0
    %s24 = sadd.s32 %s23, 1
    %s25 = scalar_select %p22, %s23, %s24
    %p28 = pneg %p22
    %p29 = scmp.eq.s32.totalorder %s13, 1
    %p30 = por %p28, %p29
    %p31 = scmp.ne.s32.totalorder %s23, %s26
    %p32 = scmp.eq.s32.totalorder %s13, 0
    %p33 = por %p31, %p32
    %p34 = scmp.ne.s32.totalorder %s23, %s26
    %p35 = scmp.eq.s32.totalorder %s18, 1
    %p36 = por %p34, %p35
    %p37 = scmp.ne.s32.totalorder %s26, %s27
    %p38 = scmp.eq.s32.totalorder %s18, 0
    %p39 = por %p37, %p38
    %p40 = scmp.ne.s32.totalorder %s26, %s27
    %p41 = scmp.eq.s32.totalorder %s19, 1
    %p42 = por %p40, %p41
    %p44 = scmp.ne.s32.totalorder %s27, %s43
    %p45 = scmp.eq.s32.totalorder %s19, 0
    %p46 = por %p44, %p45
    %s48 = sadd.s32 %s47, 1
    %p51 = scmp.eq.s32.totalorder %s13, 1
    %p52 = scmp.ne.s32.totalorder %s47, %s49
    %p53 = scmp.eq.s32.totalorder %s13, 0
    %p54 = por %p52, %p53
    %p55 = scmp.ne.s32.totalorder %s47, %s49
    %p56 = scmp.eq.s32.totalorder %s18, 1
    %p57 = por %p55, %p56
    %p58 = scmp.ne.s32.totalorder %s49, %s50
    %p59 = scmp.eq.s32.totalorder %s18, 0
    %p60 = por %p58, %p59
    %p61 = scmp.ne.s32.totalorder %s49, %s50
    %p62 = scmp.eq.s32.totalorder %s19, 1
    %p63 = por %p61, %p62
    %p65 = scmp.ne.s32.totalorder %s50, %s64
    %p66 = scmp.eq.s32.totalorder %s19, 0
    %p67 = por %p65, %p66
    %s69 = sadd.s32 %s68, 1
    %p72 = scmp.eq.s32.totalorder %s13, 1
    %p73 = scmp.ne.s32.totalorder %s68, %s70
    %p74 = scmp.eq.s32.totalorder %s13, 0
    %p75 = por %p73, %p74
    %p76 = scmp.ne.s32.totalorder %s68, %s70
    %p77 = scmp.eq.s32.totalorder %s18, 1
    %p78 = por %p76, %p77
    %p79 = scmp.ne.s32.totalorder %s70, %s71
    %p80 = scmp.eq.s32.totalorder %s18, 0
    %p81 = por %p79, %p80
    %p82 = scmp.ne.s32.totalorder %s70, %s71
    %p83 = scmp.eq.s32.totalorder %s19, 1
    %p84 = por %p82, %p83
    %p86 = scmp.ne.s32.totalorder %s71, %s85
    %p87 = scmp.eq.s32.totalorder %s19, 0
    %p88 = por %p86, %p87
    %s90 = sadd.s32 %s89, 1
    %p93 = scmp.eq.s32.totalorder %s13, 1
    %p94 = scmp.ne.s32.totalorder %s89, %s91
    %p95 = scmp.eq.s32.totalorder %s13, 0
    %p96 = por %p94, %p95
    %p97 = scmp.ne.s32.totalorder %s89, %s91
    %p98 = scmp.eq.s32.totalorder %s18, 1
    %p99 = por %p97, %p98
    %p100 = scmp.ne.s32.totalorder %s91, %s92
    %p101 = scmp.eq.s32.totalorder %s18, 0
    %p102 = por %p100, %p101
    %p103 = scmp.ne.s32.totalorder %s91, %s92
    %p104 = scmp.eq.s32.totalorder %s19, 1
    %p105 = por %p103, %p104
    %p107 = scmp.ne.s32.totalorder %s92, %s106
    %p108 = scmp.eq.s32.totalorder %s19, 0
    %p109 = por %p107, %p108
    %s111 = sadd.s32 %s110, 1
    %p114 = scmp.eq.s32.totalorder %s13, 1
    %p115 = scmp.ne.s32.totalorder %s110, %s112
    %p116 = scmp.eq.s32.totalorder %s13, 0
    %p117 = por %p115, %p116
    %p118 = scmp.ne.s32.totalorder %s110, %s112
    %p119 = scmp.eq.s32.totalorder %s18, 1
    %p120 = por %p118, %p119
    %p121 = scmp.ne.s32.totalorder %s112, %s113
    %p122 = scmp.eq.s32.totalorder %s18, 0
    %p123 = por %p121, %p122
    %p124 = scmp.ne.s32.totalorder %s112, %s113
    %p125 = scmp.eq.s32.totalorder %s19, 1
    %p126 = por %p124, %p125
    %p128 = scmp.ne.s32.totalorder %s113, %s127
    %p129 = scmp.eq.s32.totalorder %s19, 0
    %p130 = por %p128, %p129
    %s132 = sadd.s32 %s131, 1
    %p135 = scmp.eq.s32.totalorder %s13, 1
    %p136 = scmp.ne.s32.totalorder %s131, %s133
    %p137 = scmp.eq.s32.totalorder %s13, 0
    %p138 = por %p136, %p137
    %p139 = scmp.ne.s32.totalorder %s131, %s133
    %p140 = scmp.eq.s32.totalorder %s18, 1
    %p141 = por %p139, %p140
    %p142 = scmp.ne.s32.totalorder %s133, %s134
    %p143 = scmp.eq.s32.totalorder %s18, 0
    %p144 = por %p142, %p143
    %p145 = scmp.ne.s32.totalorder %s133, %s134
    %p146 = scmp.eq.s32.totalorder %s19, 1
    %p147 = por %p145, %p146
    %p149 = scmp.ne.s32.totalorder %s134, %s148
    %p150 = scmp.eq.s32.totalorder %s19, 0
    %p151 = por %p149, %p150
    %s153 = sadd.s32 %s152, 1
    %p156 = scmp.eq.s32.totalorder %s13, 1
    %p157 = scmp.ne.s32.totalorder %s152, %s154
    %p158 = scmp.eq.s32.totalorder %s13, 0
    %p159 = por %p157, %p158
    %p160 = scmp.ne.s32.totalorder %s152, %s154
    %p161 = scmp.eq.s32.totalorder %s18, 1
    %p162 = por %p160, %p161
    %p163 = scmp.ne.s32.totalorder %s154, %s155
    %p164 = scmp.eq.s32.totalorder %s18, 0
    %p165 = por %p163, %p164
    %p166 = scmp.ne.s32.totalorder %s154, %s155
    %p167 = scmp.eq.s32.totalorder %s19, 1
    %p168 = por %p166, %p167
    %p170 = scmp.ne.s32.totalorder %s155, %s169
    %p171 = scmp.eq.s32.totalorder %s19, 0
    %p172 = por %p170, %p171
    %s173 = ssub.s32 %s13, %s20
    %p174 = scmp.eq.s32.totalorder %s173, 0
    %s176 = sadd.s32 %s175, 1
    %s177 = scalar_select %p174, %s175, %s176
    %p180 = pneg %p174
    %p181 = scmp.eq.s32.totalorder %s13, 1
    %p182 = por %p180, %p181
    %p183 = scmp.ne.s32.totalorder %s175, %s178
    %p184 = scmp.eq.s32.totalorder %s13, 0
    %p185 = por %p183, %p184
    %p186 = scmp.ne.s32.totalorder %s175, %s178
    %p187 = scmp.eq.s32.totalorder %s18, 1
    %p188 = por %p186, %p187
    %p189 = scmp.ne.s32.totalorder %s178, %s179
    %p190 = scmp.eq.s32.totalorder %s18, 0
    %p191 = por %p189, %p190
    %p192 = scmp.ne.s32.totalorder %s178, %s179
    %p193 = scmp.eq.s32.totalorder %s19, 1
    %p194 = por %p192, %p193
    %p196 = scmp.ne.s32.totalorder %s179, %s195
    %p197 = scmp.eq.s32.totalorder %s19, 0
    %p198 = por %p196, %p197
    %p199 = scmp.le.s32.totalorder 1, %s13
    %p200 = scmp.lt.s32.totalorder %s13, 3
    %p201 = pnand %p199, %p200
    %p202 = pneg %p201
    // Predicated region
    $region9: #{tpu_custom_call.1} parent=5 // pred_check
      _
    $region10: #{tpu_custom_call.1} parent=5 // pred_check_branch
      %204 = sbr.rel (%p201) target = $region12
    $region11: #{tpu_custom_call.1} parent=5 // pred_region
      %s205 = ssub.s32 %s13, 1
      // Predicated region
      $region13: #{tpu_custom_call.1} parent=11 // pred_check
        %p206 = pneg %p60
      $region14: #{tpu_custom_call.1} parent=11 // pred_check_branch
        %208 = sbr.rel (%p206) target = $region16
      $region15: #{tpu_custom_call.1} parent=11 // pred_region
        _
      $region16: #{tpu_custom_call.1} parent=11 // pred_fallthru
        _
      // Predicated region
      $region17: #{tpu_custom_call.1} parent=11 // pred_check
        %p209 = pneg %p81
      $region18: #{tpu_custom_call.1} parent=11 // pred_check_branch
        %211 = sbr.rel (%p209) target = $region20
      $region19: #{tpu_custom_call.1} parent=11 // pred_region
        _
      $region20: #{tpu_custom_call.1} parent=11 // pred_fallthru
        _
      // Predicated region
      $region21: #{tpu_custom_call.1} parent=11 // pred_check
        %p212 = pneg %p102
      $region22: #{tpu_custom_call.1} parent=11 // pred_check_branch
        %214 = sbr.rel (%p212) target = $region24
      $region23: #{tpu_custom_call.1} parent=11 // pred_region
        _
      $region24: #{tpu_custom_call.1} parent=11 // pred_fallthru
        _
      // Predicated region
      $region25: #{tpu_custom_call.1} parent=11 // pred_check
        %p215 = pneg %p123
      $region26: #{tpu_custom_call.1} parent=11 // pred_check_branch
        %217 = sbr.rel (%p215) target = $region28
      $region27: #{tpu_custom_call.1} parent=11 // pred_region
        _
      $region28: #{tpu_custom_call.1} parent=11 // pred_fallthru
        _
      // Predicated region
      $region29: #{tpu_custom_call.1} parent=11 // pred_check
        %p218 = pneg %p144
      $region30: #{tpu_custom_call.1} parent=11 // pred_check_branch
        %220 = sbr.rel (%p218) target = $region32
      $region31: #{tpu_custom_call.1} parent=11 // pred_region
        _
      $region32: #{tpu_custom_call.1} parent=11 // pred_fallthru
        _
      // Predicated region
      $region33: #{tpu_custom_call.1} parent=11 // pred_check
        %p221 = pneg %p165
      $region34: #{tpu_custom_call.1} parent=11 // pred_check_branch
        %223 = sbr.rel (%p221) target = $region36
      $region35: #{tpu_custom_call.1} parent=11 // pred_region
        _
      $region36: #{tpu_custom_call.1} parent=11 // pred_fallthru
        _
    $region12: #{tpu_custom_call.1} parent=5 // pred_fallthru
      _
    %p224 = scmp.lt.s32.totalorder %s13, 2
    // Predicated region
    $region37: #{tpu_custom_call.1} parent=5 // pred_check
      %p225 = pneg %p224
    $region38: #{tpu_custom_call.1} parent=5 // pred_check_branch
      %227 = sbr.rel (%p225) target = $region40
    $region39: #{tpu_custom_call.1} parent=5 // pred_region
      // Predicated region
      $region41: #{tpu_custom_call.1} parent=39 // pred_check
        %p228 = pneg %p33
      $region42: #{tpu_custom_call.1} parent=39 // pred_check_branch
        %230 = sbr.rel (%p228) target = $region44
      $region43: #{tpu_custom_call.1} parent=39 // pred_region
        %p231 = scmp.lt.s32.totalorder %s13, 1
        %s232 = scalar_select %p231, %s13, 1
        %s233 = smul.addr %s232, 32
        %s234 = smul.addr %s233, 8
        %s235 = scalar_lea.vmem %s0, %s234
      $region44: #{tpu_custom_call.1} parent=39 // pred_fallthru
        _
    $region40: #{tpu_custom_call.1} parent=5 // pred_fallthru
      _
    %p236 = scmp.le.s32.totalorder 1, %s13
    %p237 = scmp.lt.s32.totalorder %s13, 3
    %p238 = pnand %p236, %p237
    %p239 = pneg %p238
    // Predicated region
    $region45: #{tpu_custom_call.1} parent=5 // pred_check
      _
    $region46: #{tpu_custom_call.1} parent=5 // pred_check_branch
      %241 = sbr.rel (%p238) target = $region48
    $region47: #{tpu_custom_call.1} parent=5 // pred_region
      %s242 = ssub.s32 %s13, 1
      %p243 = scmp.lt.s32.totalorder %s18, 1
      %s244 = scalar_select %p243, %s18, 1
      %s245 = smul.addr %s244, 32
      %s246 = smul.addr %s245, 8
      %s247 = scalar_lea.vmem %s0, %s246
      %p248 = pneg %p39
      %p249 = pneg %p36
      %p250 = pneg %p60
      %p251 = pneg %p57
      %p252 = pneg %p81
      %p253 = pneg %p78
      %p254 = pneg %p102
      %p255 = pneg %p99
      %p256 = pneg %p123
      %p257 = pneg %p120
      %p258 = pneg %p144
      %p259 = pneg %p141
      %p260 = pneg %p165
      %p261 = pneg %p162
      %p262 = pneg %p191
      %p263 = pneg %p188
      %p264 = scmp.lt.s32.totalorder %s18, 1
      %s265 = scalar_select %p264, %s18, 1
      %s266 = smul.addr %s265, 32
      %s267 = smul.addr %s266, 8
      %s268 = scalar_lea.vmem %s7, %s267
      %p269 = scmp.lt.s32.totalorder %s18, 1
      %s270 = scalar_select %p269, %s18, 1
      %s271 = smul.addr %s270, 32
      %s272 = smul.addr %s271, 8
      %s273 = scalar_lea.vmem %s0, %s272
      %p274 = scmp.lt.s32.totalorder %s18, 1
      %s275 = scalar_select %p274, %s18, 1
      %s276 = smul.addr %s275, 32
      %s277 = smul.addr %s276, 8
      %s278 = scalar_lea.vmem %s7, %s277
      %v280 = vld [vmem:[%s273] sm:$0xff]
      %v281 = vld [vmem:[%s273 + $0x8] sm:$0xff]
      %v282 = vld [vmem:[%s273 + $0x10] sm:$0xff]
      %v283 = vld [vmem:[%s273 + $0x18] sm:$0xff]
      %v284 = vld [vmem:[%s273 + $0x20] sm:$0xff]
      %v285 = vld [vmem:[%s273 + $0x28] sm:$0xff]
      %v286 = vld [vmem:[%s273 + $0x30] sm:$0xff]
      %v287 = vld [vmem:[%s273 + $0x38] sm:$0xff]
      %v288 = vld [vmem:[%s273 + $0x40] sm:$0xff]
      %v289 = vld [vmem:[%s273 + $0x48] sm:$0xff]
      %v290 = vld [vmem:[%s273 + $0x50] sm:$0xff]
      %v291 = vld [vmem:[%s273 + $0x58] sm:$0xff]
      %v292 = vld [vmem:[%s273 + $0x60] sm:$0xff]
      %v293 = vld [vmem:[%s273 + $0x68] sm:$0xff]
      %v294 = vld [vmem:[%s273 + $0x70] sm:$0xff]
      %v295 = vld [vmem:[%s273 + $0x78] sm:$0xff]
      %v296 = vld [vmem:[%s273 + $0x80] sm:$0xff]
      %v297 = vld [vmem:[%s273 + $0x88] sm:$0xff]
      %v298 = vld [vmem:[%s273 + $0x90] sm:$0xff]
      %v299 = vld [vmem:[%s273 + $0x98] sm:$0xff]
      %v300 = vld [vmem:[%s273 + $0xa0] sm:$0xff]
      %v301 = vld [vmem:[%s273 + $0xa8] sm:$0xff]
      %v302 = vld [vmem:[%s273 + $0xb0] sm:$0xff]
      %v303 = vld [vmem:[%s273 + $0xb8] sm:$0xff]
      %v304 = vld [vmem:[%s273 + $0xc0] sm:$0xff]
      %v305 = vld [vmem:[%s273 + $0xc8] sm:$0xff]
      %v306 = vld [vmem:[%s273 + $0xd0] sm:$0xff]
      %v307 = vld [vmem:[%s273 + $0xd8] sm:$0xff]
      %v308 = vld [vmem:[%s273 + $0xe0] sm:$0xff]
      %v309 = vld [vmem:[%s273 + $0xe8] sm:$0xff]
      %v310 = vld [vmem:[%s273 + $0xf0] sm:$0xff]
      %v311 = vld [vmem:[%s273 + $0xf8] sm:$0xff]
      %v312 = vpack.c.bf16 %v281, %v280
      %v313 = vpack.c.bf16 %v283, %v282
      %v314 = vpack.c.bf16 %v285, %v284
      %v315 = vpack.c.bf16 %v287, %v286
      %v316 = vpack.c.bf16 %v289, %v288
      %v317 = vpack.c.bf16 %v291, %v290
      %v318 = vpack.c.bf16 %v293, %v292
      %v319 = vpack.c.bf16 %v295, %v294
      %v320 = vpack.c.bf16 %v297, %v296
      %v321 = vpack.c.bf16 %v299, %v298
      %v322 = vpack.c.bf16 %v301, %v300
      %v323 = vpack.c.bf16 %v303, %v302
      %v324 = vpack.c.bf16 %v305, %v304
      %v325 = vpack.c.bf16 %v307, %v306
      %v326 = vpack.c.bf16 %v309, %v308
      %v327 = vpack.c.bf16 %v311, %v310
      %v328 = vld [vmem:[%s1] sm:$0xf]
      %v329 = vld [vmem:[%s2] sm:$0x1]
      %v331 = vlaneseq
      %v332 = vshrl.u32 %v331, 7
      %v333 = vsub.s32 0, %v332
      %v334 = vrot.slane %v329, %v333
      %vm336 = vcmask 64512
      %v338 = vsel %vm336, %v312, 0
      %v341 = vsel %vm336, %v313, 0
      %v344 = vsel %vm336, %v314, 0
      %v347 = vsel %vm336, %v315, 0
      %v350 = vsel %vm336, %v316, 0
      %v353 = vsel %vm336, %v317, 0
      %v356 = vsel %vm336, %v318, 0
      %v359 = vsel %vm336, %v319, 0
      %v362 = vsel %vm336, %v320, 0
      %v365 = vsel %vm336, %v321, 0
      %v368 = vsel %vm336, %v322, 0
      %v371 = vsel %vm336, %v323, 0
      %v374 = vsel %vm336, %v324, 0
      %v377 = vsel %vm336, %v325, 0
      %v380 = vsel %vm336, %v326, 0
      %v383 = vsel %vm336, %v327, 0
      %vm385 = vcmask 1043456
      %v387 = vsel %vm385, %v328, 0
      %389 = vmatprep.subr.bf16.mxu0 0
      %390 = vmatpush1.bf16.msra.mxu0 %v387
      %391 = vmatprep.subr.bf16.mxu0 0
      %392 = vmatpush1.bf16.msra.mxu0 0
      %393 = vmatprep.subr.bf16.mxu0 0
      %394 = vmatpush1.bf16.msra.mxu0 0
      %395 = vmatprep.subr.bf16.mxu0 0
      %396 = vmatpush1.bf16.msra.mxu0 0
      %397 = vmatprep.subr.bf16.mxu0 0
      %398 = vmatpush1.bf16.msra.mxu0 0
      %399 = vmatprep.subr.bf16.mxu0 0
      %400 = vmatpush1.bf16.msra.mxu0 0
      %401 = vmatprep.subr.bf16.mxu0 0
      %402 = vmatpush1.bf16.msra.mxu0 0
      %403 = vmatprep.subr.bf16.mxu0 0
      %404 = vmatpush1.bf16.msra.mxu0 0
      %405 = vmatprep.subr.bf16.mxu0 0
      %406 = vmatpush1.bf16.msra.mxu0 0
      %407 = vmatprep.subr.bf16.mxu0 0
      %408 = vmatpush1.bf16.msra.mxu0 0
      %409 = vmatprep.subr.bf16.mxu0 0
      %410 = vmatpush1.bf16.msra.mxu0 0
      %411 = vmatprep.subr.bf16.mxu0 0
      %412 = vmatpush1.bf16.msra.mxu0 0
      %413 = vmatprep.subr.bf16.mxu0 0
      %414 = vmatpush1.bf16.msra.mxu0 0
      %415 = vmatprep.subr.bf16.mxu0 0
      %416 = vmatpush1.bf16.msra.mxu0 0
      %417 = vmatprep.subr.bf16.mxu0 0
      %418 = vmatpush1.bf16.msra.mxu0 0
      %419 = vmatprep.subr.bf16.mxu0 0
      %420 = vmatpush1.bf16.msra.mxu0 0
      %421 = vmatprep.mubr.bf16.mxu0 0
      %422 = vmatmul.mubr.bf16.gmra.mrb[0].mxu0 %v338
      %v423 = vpop.f32.mrb[0].mxu0
      %v424 = vadd.f32 %v334, %v423
      %v425 = vpop.f32.mrb[0].mxu0
      %v426 = vpop.f32.mrb[0].mxu0
      %v427 = vadd.f32 %v334, %v426
      %v428 = vpop.f32.mrb[0].mxu0
      %429 = vmatprep.mubr.bf16.mxu0 0
      %430 = vmatmul.mubr.bf16.gmra.mrb[0].mxu0 %v341
      %v431 = vpop.f32.mrb[0].mxu0
      %v432 = vadd.f32 %v334, %v431
      %v433 = vpop.f32.mrb[0].mxu0
      %v434 = vpop.f32.mrb[0].mxu0
      %v435 = vadd.f32 %v334, %v434
      %v436 = vpop.f32.mrb[0].mxu0
      %437 = vmatprep.mubr.bf16.mxu0 0
      %438 = vmatmul.mubr.bf16.gmra.mrb[0].mxu0 %v344
      %v439 = vpop.f32.mrb[0].mxu0
      %v440 = vadd.f32 %v334, %v439
      %v441 = vpop.f32.mrb[0].mxu0
      %v442 = vpop.f32.mrb[0].mxu0
      %v443 = vadd.f32 %v334, %v442
      %v444 = vpop.f32.mrb[0].mxu0
      %445 = vmatprep.mubr.bf16.mxu0 0
      %446 = vmatmul.mubr.bf16.gmra.mrb[0].mxu0 %v347
      %v447 = vpop.f32.mrb[0].mxu0
      %v448 = vadd.f32 %v334, %v447
      %v449 = vpop.f32.mrb[0].mxu0
      %v450 = vpop.f32.mrb[0].mxu0
      %v451 = vadd.f32 %v334, %v450
      %v452 = vpop.f32.mrb[0].mxu0
      %453 = vmatprep.mubr.bf16.mxu0 0
      %454 = vmatmul.mubr.bf16.gmra.mrb[0].mxu0 %v350
      %v455 = vpop.f32.mrb[0].mxu0
      %v456 = vadd.f32 %v334, %v455
      %v457 = vpop.f32.mrb[0].mxu0
      %v458 = vpop.f32.mrb[0].mxu0
      %v459 = vadd.f32 %v334, %v458
      %v460 = vpop.f32.mrb[0].mxu0
      %461 = vmatprep.mubr.bf16.mxu0 0
      %462 = vmatmul.mubr.bf16.gmra.mrb[0].mxu0 %v353
      %v463 = vpop.f32.mrb[0].mxu0
      %v464 = vadd.f32 %v334, %v463
      %v465 = vpop.f32.mrb[0].mxu0
      %v466 = vpop.f32.mrb[0].mxu0
      %v467 = vadd.f32 %v334, %v466
      %v468 = vpop.f32.mrb[0].mxu0
      %469 = vmatprep.mubr.bf16.mxu0 0
      %470 = vmatmul.mubr.bf16.gmra.mrb[0].mxu0 %v356
      %v471 = vpop.f32.mrb[0].mxu0
      %v472 = vadd.f32 %v334, %v471
      %v473 = vpop.f32.mrb[0].mxu0
      %v474 = vpop.f32.mrb[0].mxu0
      %v475 = vadd.f32 %v334, %v474
      %v476 = vpop.f32.mrb[0].mxu0
      %477 = vmatprep.mubr.bf16.mxu0 0
      %478 = vmatmul.mubr.bf16.gmra.mrb[0].mxu0 %v359
      %v479 = vpop.f32.mrb[0].mxu0
      %v480 = vadd.f32 %v334, %v479
      %v481 = vpop.f32.mrb[0].mxu0
      %v482 = vpop.f32.mrb[0].mxu0
      %v483 = vadd.f32 %v334, %v482
      %v484 = vpop.f32.mrb[0].mxu0
      %485 = vmatprep.mubr.bf16.mxu0 0
      %486 = vmatmul.mubr.bf16.gmra.mrb[0].mxu0 %v362
      %v487 = vpop.f32.mrb[0].mxu0
      %v488 = vadd.f32 %v334, %v487
      %v489 = vpop.f32.mrb[0].mxu0
      %v490 = vpop.f32.mrb[0].mxu0
      %v491 = vadd.f32 %v334, %v490
      %v492 = vpop.f32.mrb[0].mxu0
      %493 = vmatprep.mubr.bf16.mxu0 0
      %494 = vmatmul.mubr.bf16.gmra.mrb[0].mxu0 %v365
      %v495 = vpop.f32.mrb[0].mxu0
      %v496 = vadd.f32 %v334, %v495
      %v497 = vpop.f32.mrb[0].mxu0
      %v498 = vpop.f32.mrb[0].mxu0
      %v499 = vadd.f32 %v334, %v498
      %v500 = vpop.f32.mrb[0].mxu0
      %501 = vmatprep.mubr.bf16.mxu0 0
      %502 = vmatmul.mubr.bf16.gmra.mrb[0].mxu0 %v368
      %v503 = vpop.f32.mrb[0].mxu0
      %v504 = vadd.f32 %v334, %v503
      %v505 = vpop.f32.mrb[0].mxu0
      %v506 = vpop.f32.mrb[0].mxu0
      %v507 = vadd.f32 %v334, %v506
      %v508 = vpop.f32.mrb[0].mxu0
      %509 = vmatprep.mubr.bf16.mxu0 0
      %510 = vmatmul.mubr.bf16.gmra.mrb[0].mxu0 %v371
      %v511 = vpop.f32.mrb[0].mxu0
      %v512 = vadd.f32 %v334, %v511
      %v513 = vpop.f32.mrb[0].mxu0
      %v514 = vpop.f32.mrb[0].mxu0
      %v515 = vadd.f32 %v334, %v514
      %v516 = vpop.f32.mrb[0].mxu0
      %517 = vmatprep.mubr.bf16.mxu0 0
      %518 = vmatmul.mubr.bf16.gmra.mrb[0].mxu0 %v374
      %v519 = vpop.f32.mrb[0].mxu0
      %v520 = vadd.f32 %v334, %v519
      %v521 = vpop.f32.mrb[0].mxu0
      %v522 = vpop.f32.mrb[0].mxu0
      %v523 = vadd.f32 %v334, %v522
      %v524 = vpop.f32.mrb[0].mxu0
      %525 = vmatprep.mubr.bf16.mxu0 0
      %526 = vmatmul.mubr.bf16.gmra.mrb[0].mxu0 %v377
      %v527 = vpop.f32.mrb[0].mxu0
      %v528 = vadd.f32 %v334, %v527
      %v529 = vpop.f32.mrb[0].mxu0
      %v530 = vpop.f32.mrb[0].mxu0
      %v531 = vadd.f32 %v334, %v530
      %v532 = vpop.f32.mrb[0].mxu0
      %533 = vmatprep.mubr.bf16.mxu0 0
      %534 = vmatmul.mubr.bf16.gmra.mrb[0].mxu0 %v380
      %v535 = vpop.f32.mrb[0].mxu0
      %v536 = vadd.f32 %v334, %v535
      %v537 = vpop.f32.mrb[0].mxu0
      %v538 = vpop.f32.mrb[0].mxu0
      %v539 = vadd.f32 %v334, %v538
      %v540 = vpop.f32.mrb[0].mxu0
      %541 = vmatprep.mubr.bf16.mxu0 0
      %542 = vmatmul.mubr.bf16.gmra.mrb[0].mxu0 %v383
      %v543 = vpop.f32.mrb[0].mxu0
      %v544 = vadd.f32 %v334, %v543
      %v545 = vpop.f32.mrb[0].mxu0
      %v546 = vpop.f32.mrb[0].mxu0
      %v547 = vadd.f32 %v334, %v546
      %v548 = vpop.f32.mrb[0].mxu0
      %549 = vdwg.mxu0
      %v550 = vmax.f32 %v424, 0.0
      %v551 = vmax.f32 %v427, 0.0
      %v552 = vmax.f32 %v432, 0.0
      %v553 = vmax.f32 %v435, 0.0
      %v554 = vmax.f32 %v440, 0.0
      %v555 = vmax.f32 %v443, 0.0
      %v556 = vmax.f32 %v448, 0.0
      %v557 = vmax.f32 %v451, 0.0
      %v558 = vmax.f32 %v456, 0.0
      %v559 = vmax.f32 %v459, 0.0
      %v560 = vmax.f32 %v464, 0.0
      %v561 = vmax.f32 %v467, 0.0
      %v562 = vmax.f32 %v472, 0.0
      %v563 = vmax.f32 %v475, 0.0
      %v564 = vmax.f32 %v480, 0.0
      %v565 = vmax.f32 %v483, 0.0
      %v566 = vmax.f32 %v488, 0.0
      %v567 = vmax.f32 %v491, 0.0
      %v568 = vmax.f32 %v496, 0.0
      %v569 = vmax.f32 %v499, 0.0
      %v570 = vmax.f32 %v504, 0.0
      %v571 = vmax.f32 %v507, 0.0
      %v572 = vmax.f32 %v512, 0.0
      %v573 = vmax.f32 %v515, 0.0
      %v574 = vmax.f32 %v520, 0.0
      %v575 = vmax.f32 %v523, 0.0
      %v576 = vmax.f32 %v528, 0.0
      %v577 = vmax.f32 %v531, 0.0
      %v578 = vmax.f32 %v536, 0.0
      %v579 = vmax.f32 %v539, 0.0
      %v580 = vmax.f32 %v544, 0.0
      %v581 = vmax.f32 %v547, 0.0
      %v582 = vmin.f32 %v550, 6.0
      %v583 = vmin.f32 %v551, 6.0
      %v584 = vmin.f32 %v552, 6.0
      %v585 = vmin.f32 %v553, 6.0
      %v586 = vmin.f32 %v554, 6.0
      %v587 = vmin.f32 %v555, 6.0
      %v588 = vmin.f32 %v556, 6.0
      %v589 = vmin.f32 %v557, 6.0
      %v590 = vmin.f32 %v558, 6.0
      %v591 = vmin.f32 %v559, 6.0
      %v592 = vmin.f32 %v560, 6.0
      %v593 = vmin.f32 %v561, 6.0
      %v594 = vmin.f32 %v562, 6.0
      %v595 = vmin.f32 %v563, 6.0
      %v596 = vmin.f32 %v564, 6.0
      %v597 = vmin.f32 %v565, 6.0
      %v598 = vmin.f32 %v566, 6.0
      %v599 = vmin.f32 %v567, 6.0
      %v600 = vmin.f32 %v568, 6.0
      %v601 = vmin.f32 %v569, 6.0
      %v602 = vmin.f32 %v570, 6.0
      %v603 = vmin.f32 %v571, 6.0
      %v604 = vmin.f32 %v572, 6.0
      %v605 = vmin.f32 %v573, 6.0
      %v606 = vmin.f32 %v574, 6.0
      %v607 = vmin.f32 %v575, 6.0
      %v608 = vmin.f32 %v576, 6.0
      %v609 = vmin.f32 %v577, 6.0
      %v610 = vmin.f32 %v578, 6.0
      %v611 = vmin.f32 %v579, 6.0
      %v612 = vmin.f32 %v580, 6.0
      %v613 = vmin.f32 %v581, 6.0
      %vm614 = vcmask 130048
      %615 = vst.msk [vmem:[#allocation2] sm:$0xff] %vm614, 0.0
      %616 = vst.msk [vmem:[#allocation2 + $0x8] sm:$0xff] %vm614, 0.0
      %vm617 = vcmask 123904
      %618 = vst.msk [vmem:[#allocation2 + $0x10] sm:$0x3] %vm617, 0.0
      %s619 = scalar_lea.vmem [#allocation2], 408
      %620 = vst.msk [vmem:[%s619] sm:$0xff] %vm614, 0.0
      %621 = vst.msk [vmem:[%s619 + $0x8] sm:$0xff] %vm614, 0.0
      %622 = vst.msk [vmem:[%s619 + $0x10] sm:$0x3] %vm617, 0.0
      %s623 = scalar_lea.vmem [#allocation2], 24
      %vm624 = vcmask 122880
      %625 = vst.msk [vmem:[%s623] sm:$0x1] %vm624, 0.0
      %626 = vst.msk [vmem:[%s623 + $0x18] sm:$0x1] %vm624, 0.0
      %627 = vst.msk [vmem:[%s623 + $0x30] sm:$0x1] %vm624, 0.0
      %628 = vst.msk [vmem:[%s623 + $0x48] sm:$0x1] %vm624, 0.0
      %629 = vst.msk [vmem:[%s623 + $0x60] sm:$0x1] %vm624, 0.0
      %630 = vst.msk [vmem:[%s623 + $0x78] sm:$0x1] %vm624, 0.0
      %631 = vst.msk [vmem:[%s623 + $0x90] sm:$0x1] %vm624, 0.0
      %632 = vst.msk [vmem:[%s623 + $0xa8] sm:$0x1] %vm624, 0.0
      %633 = vst.msk [vmem:[%s623 + $0xc0] sm:$0x1] %vm624, 0.0
      %634 = vst.msk [vmem:[%s623 + $0xd8] sm:$0x1] %vm624, 0.0
      %635 = vst.msk [vmem:[%s623 + $0xf0] sm:$0x1] %vm624, 0.0
      %636 = vst.msk [vmem:[%s623 + $0x108] sm:$0x1] %vm624, 0.0
      %637 = vst.msk [vmem:[%s623 + $0x120] sm:$0x1] %vm624, 0.0
      %638 = vst.msk [vmem:[%s623 + $0x138] sm:$0x1] %vm624, 0.0
      %639 = vst.msk [vmem:[%s623 + $0x150] sm:$0x1] %vm624, 0.0
      %640 = vst.msk [vmem:[%s623 + $0x168] sm:$0x1] %vm624, 0.0
      %641 = vst.msk [vmem:[%s623 + $0x11] sm:$0x1] %vm624, 0.0
      %642 = vst.msk [vmem:[%s623 + $0x29] sm:$0x1] %vm624, 0.0
      %643 = vst.msk [vmem:[%s623 + $0x41] sm:$0x1] %vm624, 0.0
      %644 = vst.msk [vmem:[%s623 + $0x59] sm:$0x1] %vm624, 0.0
      %645 = vst.msk [vmem:[%s623 + $0x71] sm:$0x1] %vm624, 0.0
      %646 = vst.msk [vmem:[%s623 + $0x89] sm:$0x1] %vm624, 0.0
      %647 = vst.msk [vmem:[%s623 + $0xa1] sm:$0x1] %vm624, 0.0
      %648 = vst.msk [vmem:[%s623 + $0xb9] sm:$0x1] %vm624, 0.0
      %649 = vst.msk [vmem:[%s623 + $0xd1] sm:$0x1] %vm624, 0.0
      %650 = vst.msk [vmem:[%s623 + $0xe9] sm:$0x1] %vm624, 0.0
      %651 = vst.msk [vmem:[%s623 + $0x101] sm:$0x1] %vm624, 0.0
      %652 = vst.msk [vmem:[%s623 + $0x119] sm:$0x1] %vm624, 0.0
      %653 = vst.msk [vmem:[%s623 + $0x131] sm:$0x1] %vm624, 0.0
      %654 = vst.msk [vmem:[%s623 + $0x149] sm:$0x1] %vm624, 0.0
      %655 = vst.msk [vmem:[%s623 + $0x161] sm:$0x1] %vm624, 0.0
      %656 = vst.msk [vmem:[%s623 + $0x179] sm:$0x1] %vm624, 0.0
      %657 = vst.msk [vmem:[%s623 + $0x1] sm:$0xff] %vm614, %v582
      %658 = vst.msk [vmem:[%s623 + $0x9] sm:$0xff] %vm614, %v583
      %659 = vst.msk [vmem:[%s623 + $0x19] sm:$0xff] %vm614, %v584
      %660 = vst.msk [vmem:[%s623 + $0x21] sm:$0xff] %vm614, %v585
      %661 = vst.msk [vmem:[%s623 + $0x31] sm:$0xff] %vm614, %v586
      %662 = vst.msk [vmem:[%s623 + $0x39] sm:$0xff] %vm614, %v587
      %663 = vst.msk [vmem:[%s623 + $0x49] sm:$0xff] %vm614, %v588
      %664 = vst.msk [vmem:[%s623 + $0x51] sm:$0xff] %vm614, %v589
      %665 = vst.msk [vmem:[%s623 + $0x61] sm:$0xff] %vm614, %v590
      %666 = vst.msk [vmem:[%s623 + $0x69] sm:$0xff] %vm614, %v591
      %667 = vst.msk [vmem:[%s623 + $0x79] sm:$0xff] %vm614, %v592
      %668 = vst.msk [vmem:[%s623 + $0x81] sm:$0xff] %vm614, %v593
      %669 = vst.msk [vmem:[%s623 + $0x91] sm:$0xff] %vm614, %v594
      %670 = vst.msk [vmem:[%s623 + $0x99] sm:$0xff] %vm614, %v595
      %671 = vst.msk [vmem:[%s623 + $0xa9] sm:$0xff] %vm614, %v596
      %672 = vst.msk [vmem:[%s623 + $0xb1] sm:$0xff] %vm614, %v597
      %673 = vst.msk [vmem:[%s623 + $0xc1] sm:$0xff] %vm614, %v598
      %674 = vst.msk [vmem:[%s623 + $0xc9] sm:$0xff] %vm614, %v599
      %675 = vst.msk [vmem:[%s623 + $0xd9] sm:$0xff] %vm614, %v600
      %676 = vst.msk [vmem:[%s623 + $0xe1] sm:$0xff] %vm614, %v601
      %677 = vst.msk [vmem:[%s623 + $0xf1] sm:$0xff] %vm614, %v602
      %678 = vst.msk [vmem:[%s623 + $0xf9] sm:$0xff] %vm614, %v603
      %679 = vst.msk [vmem:[%s623 + $0x109] sm:$0xff] %vm614, %v604
      %680 = vst.msk [vmem:[%s623 + $0x111] sm:$0xff] %vm614, %v605
      %681 = vst.msk [vmem:[%s623 + $0x121] sm:$0xff] %vm614, %v606
      %682 = vst.msk [vmem:[%s623 + $0x129] sm:$0xff] %vm614, %v607
      %683 = vst.msk [vmem:[%s623 + $0x139] sm:$0xff] %vm614, %v608
      %684 = vst.msk [vmem:[%s623 + $0x141] sm:$0xff] %vm614, %v609
      %685 = vst.msk [vmem:[%s623 + $0x151] sm:$0xff] %vm614, %v610
      %686 = vst.msk [vmem:[%s623 + $0x159] sm:$0xff] %vm614, %v611
      %687 = vst.msk [vmem:[%s623 + $0x169] sm:$0xff] %vm614, %v612
      %688 = vst.msk [vmem:[%s623 + $0x171] sm:$0xff] %vm614, %v613
      %v689 = vld [vmem:[%s3] sm:$0xff]
      %v690 = vld [vmem:[%s3 + $0x8] sm:$0x1]
      %v691 = vld [vmem:[#allocation2] sm:$0xff]
      %v692 = vld [vmem:[#allocation2 + $0x8] sm:$0xff]
      %v693 = vld [vmem:[#allocation2 + $0x18] sm:$0xff]
      %v694 = vld [vmem:[#allocation2 + $0x20] sm:$0xff]
      %v695 = vld [vmem:[#allocation2 + $0x30] sm:$0xff]
      %v696 = vld [vmem:[#allocation2 + $0x38] sm:$0xff]
      %v697 = vld [vmem:[#allocation2 + $0x48] sm:$0xff]
      %v698 = vld [vmem:[#allocation2 + $0x50] sm:$0xff]
      %v699 = vld [vmem:[#allocation2 + $0x60] sm:$0xff]
      %v700 = vld [vmem:[#allocation2 + $0x68] sm:$0xff]
      %v701 = vld [vmem:[#allocation2 + $0x78] sm:$0xff]
      %v702 = vld [vmem:[#allocation2 + $0x80] sm:$0xff]
      %v703 = vld [vmem:[#allocation2 + $0x90] sm:$0xff]
      %v704 = vld [vmem:[#allocation2 + $0x98] sm:$0xff]
      %v705 = vld [vmem:[#allocation2 + $0xa8] sm:$0xff]
      %v706 = vld [vmem:[#allocation2 + $0xb0] sm:$0xff]
      %v707 = vld [vmem:[#allocation2 + $0xc0] sm:$0xff]
      %v708 = vld [vmem:[#allocation2 + $0xc8] sm:$0xff]
      %v709 = vld [vmem:[#allocation2 + $0xd8] sm:$0xff]
      %v710 = vld [vmem:[#allocation2 + $0xe0] sm:$0xff]
      %v711 = vld [vmem:[#allocation2 + $0xf0] sm:$0xff]
      %v712 = vld [vmem:[#allocation2 + $0xf8] sm:$0xff]
      %v713 = vld [vmem:[#allocation2 + $0x108] sm:$0xff]
      %v714 = vld [vmem:[#allocation2 + $0x110] sm:$0xff]
      %v715 = vld [vmem:[#allocation2 + $0x120] sm:$0xff]
      %v716 = vld [vmem:[#allocation2 + $0x128] sm:$0xff]
      %v717 = vld [vmem:[#allocation2 + $0x138] sm:$0xff]
      %v718 = vld [vmem:[#allocation2 + $0x140] sm:$0xff]
      %v719 = vld [vmem:[#allocation2 + $0x150] sm:$0xff]
      %v720 = vld [vmem:[#allocation2 + $0x158] sm:$0xff]
      %v721 = vld [vmem:[#allocation2 + $0x168] sm:$0xff]
      %v722 = vld [vmem:[#allocation2 + $0x170] sm:$0xff]
      %v723 = vlaneseq
      %v724 = vshrl.u32 %v723, 7
      %v725 = vsub.s32 0, %v724
      %v726 = vrot.slane %v689, %v725
      %v727 = vmul.f32 %v691, %v726
      %v728 = vmul.f32 %v692, %v726
      %v729 = vmul.f32 %v693, %v726
      %v730 = vmul.f32 %v694, %v726
      %v731 = vmul.f32 %v695, %v726
      %v732 = vmul.f32 %v696, %v726
      %v733 = vmul.f32 %v697, %v726
      %v734 = vmul.f32 %v698, %v726
      %v735 = vmul.f32 %v699, %v726
      %v736 = vmul.f32 %v700, %v726
      %v737 = vmul.f32 %v701, %v726
      %v738 = vmul.f32 %v702, %v726
      %v739 = vmul.f32 %v703, %v726
      %v740 = vmul.f32 %v704, %v726
      %v741 = vmul.f32 %v705, %v726
      %v742 = vmul.f32 %v706, %v726
      %v743 = vmul.f32 %v707, %v726
      %v744 = vmul.f32 %v708, %v726
      %v745 = vmul.f32 %v709, %v726
      %v746 = vmul.f32 %v710, %v726
      %v747 = vmul.f32 %v711, %v726
      %v748 = vmul.f32 %v712, %v726
      %v749 = vmul.f32 %v713, %v726
      %v750 = vmul.f32 %v714, %v726
      %v751 = vmul.f32 %v715, %v726
      %v752 = vmul.f32 %v716, %v726
      %v753 = vmul.f32 %v717, %v726
      %v754 = vmul.f32 %v718, %v726
      %v755 = vmul.f32 %v719, %v726
      %v756 = vmul.f32 %v720, %v726
      %v757 = vmul.f32 %v721, %v726
      %v758 = vmul.f32 %v722, %v726
      %v759 = vadd.f32 %v727, 0.0
      %v760 = vadd.f32 %v728, 0.0
      %v761 = vadd.f32 %v729, 0.0
      %v762 = vadd.f32 %v730, 0.0
      %v763 = vadd.f32 %v731, 0.0
      %v764 = vadd.f32 %v732, 0.0
      %v765 = vadd.f32 %v733, 0.0
      %v766 = vadd.f32 %v734, 0.0
      %v767 = vadd.f32 %v735, 0.0
      %v768 = vadd.f32 %v736, 0.0
      %v769 = vadd.f32 %v737, 0.0
      %v770 = vadd.f32 %v738, 0.0
      %v771 = vadd.f32 %v739, 0.0
      %v772 = vadd.f32 %v740, 0.0
      %v773 = vadd.f32 %v741, 0.0
      %v774 = vadd.f32 %v742, 0.0
      %v775 = vadd.f32 %v743, 0.0
      %v776 = vadd.f32 %v744, 0.0
      %v777 = vadd.f32 %v745, 0.0
      %v778 = vadd.f32 %v746, 0.0
      %v779 = vadd.f32 %v747, 0.0
      %v780 = vadd.f32 %v748, 0.0
      %v781 = vadd.f32 %v749, 0.0
      %v782 = vadd.f32 %v750, 0.0
      %v783 = vadd.f32 %v751, 0.0
      %v784 = vadd.f32 %v752, 0.0
      %v785 = vadd.f32 %v753, 0.0
      %v786 = vadd.f32 %v754, 0.0
      %v787 = vadd.f32 %v755, 0.0
      %v788 = vadd.f32 %v756, 0.0
      %v789 = vadd.f32 %v757, 0.0
      %v790 = vadd.f32 %v758, 0.0
      %v791 = vld [vmem:[#allocation2 + $0x1] sm:$0xff]
      %v792 = vld [vmem:[#allocation2 + $0x9] sm:$0xff]
      %v793 = vld [vmem:[#allocation2 + $0x19] sm:$0xff]
      %v794 = vld [vmem:[#allocation2 + $0x21] sm:$0xff]
      %v795 = vld [vmem:[#allocation2 + $0x31] sm:$0xff]
      %v796 = vld [vmem:[#allocation2 + $0x39] sm:$0xff]
      %v797 = vld [vmem:[#allocation2 + $0x49] sm:$0xff]
      %v798 = vld [vmem:[#allocation2 + $0x51] sm:$0xff]
      %v799 = vld [vmem:[#allocation2 + $0x61] sm:$0xff]
      %v800 = vld [vmem:[#allocation2 + $0x69] sm:$0xff]
      %v801 = vld [vmem:[#allocation2 + $0x79] sm:$0xff]
      %v802 = vld [vmem:[#allocation2 + $0x81] sm:$0xff]
      %v803 = vld [vmem:[#allocation2 + $0x91] sm:$0xff]
      %v804 = vld [vmem:[#allocation2 + $0x99] sm:$0xff]
      %v805 = vld [vmem:[#allocation2 + $0xa9] sm:$0xff]
      %v806 = vld [vmem:[#allocation2 + $0xb1] sm:$0xff]
      %v807 = vld [vmem:[#allocation2 + $0xc1] sm:$0xff]
      %v808 = vld [vmem:[#allocation2 + $0xc9] sm:$0xff]
      %v809 = vld [vmem:[#allocation2 + $0xd9] sm:$0xff]
      %v810 = vld [vmem:[#allocation2 + $0xe1] sm:$0xff]
      %v811 = vld [vmem:[#allocation2 + $0xf1] sm:$0xff]
      %v812 = vld [vmem:[#allocation2 + $0xf9] sm:$0xff]
      %v813 = vld [vmem:[#allocation2 + $0x109] sm:$0xff]
      %v814 = vld [vmem:[#allocation2 + $0x111] sm:$0xff]
      %v815 = vld [vmem:[#allocation2 + $0x121] sm:$0xff]
      %v816 = vld [vmem:[#allocation2 + $0x129] sm:$0xff]
      %v817 = vld [vmem:[#allocation2 + $0x139] sm:$0xff]
      %v818 = vld [vmem:[#allocation2 + $0x141] sm:$0xff]
      %v819 = vld [vmem:[#allocation2 + $0x151] sm:$0xff]
      %v820 = vld [vmem:[#allocation2 + $0x159] sm:$0xff]
      %v821 = vld [vmem:[#allocation2 + $0x169] sm:$0xff]
      %v822 = vld [vmem:[#allocation2 + $0x171] sm:$0xff]
      %v823 = vlaneseq
      %v824 = vshrl.u32 %v823, 7
      %v825 = vsub.s32 1, %v824
      %v826 = vrot.slane %v689, %v825
      %v827 = vmul.f32 %v791, %v826
      %v828 = vmul.f32 %v792, %v826
      %v829 = vmul.f32 %v793, %v826
      %v830 = vmul.f32 %v794, %v826
      %v831 = vmul.f32 %v795, %v826
      %v832 = vmul.f32 %v796, %v826
      %v833 = vmul.f32 %v797, %v826
      %v834 = vmul.f32 %v798, %v826
      %v835 = vmul.f32 %v799, %v826
      %v836 = vmul.f32 %v800, %v826
      %v837 = vmul.f32 %v801, %v826
      %v838 = vmul.f32 %v802, %v826
      %v839 = vmul.f32 %v803, %v826
      %v840 = vmul.f32 %v804, %v826
      %v841 = vmul.f32 %v805, %v826
      %v842 = vmul.f32 %v806, %v826
      %v843 = vmul.f32 %v807, %v826
      %v844 = vmul.f32 %v808, %v826
      %v845 = vmul.f32 %v809, %v826
      %v846 = vmul.f32 %v810, %v826
      %v847 = vmul.f32 %v811, %v826
      %v848 = vmul.f32 %v812, %v826
      %v849 = vmul.f32 %v813, %v826
      %v850 = vmul.f32 %v814, %v826
      %v851 = vmul.f32 %v815, %v826
      %v852 = vmul.f32 %v816, %v826
      %v853 = vmul.f32 %v817, %v826
      %v854 = vmul.f32 %v818, %v826
      %v855 = vmul.f32 %v819, %v826
      %v856 = vmul.f32 %v820, %v826
      %v857 = vmul.f32 %v821, %v826
      %v858 = vmul.f32 %v822, %v826
      %v859 = vadd.f32 %v759, %v827
      %v860 = vadd.f32 %v760, %v828
      %v861 = vadd.f32 %v761, %v829
      %v862 = vadd.f32 %v762, %v830
      %v863 = vadd.f32 %v763, %v831
      %v864 = vadd.f32 %v764, %v832
      %v865 = vadd.f32 %v765, %v833
      %v866 = vadd.f32 %v766, %v834
      %v867 = vadd.f32 %v767, %v835
      %v868 = vadd.f32 %v768, %v836
      %v869 = vadd.f32 %v769, %v837
      %v870 = vadd.f32 %v770, %v838
      %v871 = vadd.f32 %v771, %v839
      %v872 = vadd.f32 %v772, %v840
      %v873 = vadd.f32 %v773, %v841
      %v874 = vadd.f32 %v774, %v842
      %v875 = vadd.f32 %v775, %v843
      %v876 = vadd.f32 %v776, %v844
      %v877 = vadd.f32 %v777, %v845
      %v878 = vadd.f32 %v778, %v846
      %v879 = vadd.f32 %v779, %v847
      %v880 = vadd.f32 %v780, %v848
      %v881 = vadd.f32 %v781, %v849
      %v882 = vadd.f32 %v782, %v850
      %v883 = vadd.f32 %v783, %v851
      %v884 = vadd.f32 %v784, %v852
      %v885 = vadd.f32 %v785, %v853
      %v886 = vadd.f32 %v786, %v854
      %v887 = vadd.f32 %v787, %v855
      %v888 = vadd.f32 %v788, %v856
      %v889 = vadd.f32 %v789, %v857
      %v890 = vadd.f32 %v790, %v858
      %v891 = vld [vmem:[#allocation2 + $0x2] sm:$0xff]
      %v892 = vld [vmem:[#allocation2 + $0xa] sm:$0xff]
      %v893 = vld [vmem:[#allocation2 + $0x1a] sm:$0xff]
      %v894 = vld [vmem:[#allocation2 + $0x22] sm:$0xff]
      %v895 = vld [vmem:[#allocation2 + $0x32] sm:$0xff]
      %v896 = vld [vmem:[#allocation2 + $0x3a] sm:$0xff]
      %v897 = vld [vmem:[#allocation2 + $0x4a] sm:$0xff]
      %v898 = vld [vmem:[#allocation2 + $0x52] sm:$0xff]
      %v899 = vld [vmem:[#allocation2 + $0x62] sm:$0xff]
      %v900 = vld [vmem:[#allocation2 + $0x6a] sm:$0xff]
      %v901 = vld [vmem:[#allocation2 + $0x7a] sm:$0xff]
      %v902 = vld [vmem:[#allocation2 + $0x82] sm:$0xff]
      %v903 = vld [vmem:[#allocation2 + $0x92] sm:$0xff]
      %v904 = vld [vmem:[#allocation2 + $0x9a] sm:$0xff]
      %v905 = vld [vmem:[#allocation2 + $0xaa] sm:$0xff]
      %v906 = vld [vmem:[#allocation2 + $0xb2] sm:$0xff]
      %v907 = vld [vmem:[#allocation2 + $0xc2] sm:$0xff]
      %v908 = vld [vmem:[#allocation2 + $0xca] sm:$0xff]
      %v909 = vld [vmem:[#allocation2 + $0xda] sm:$0xff]
      %v910 = vld [vmem:[#allocation2 + $0xe2] sm:$0xff]
      %v911 = vld [vmem:[#allocation2 + $0xf2] sm:$0xff]
      %v912 = vld [vmem:[#allocation2 + $0xfa] sm:$0xff]
      %v913 = vld [vmem:[#allocation2 + $0x10a] sm:$0xff]
      %v914 = vld [vmem:[#allocation2 + $0x112] sm:$0xff]
      %v915 = vld [vmem:[#allocation2 + $0x122] sm:$0xff]
      %v916 = vld [vmem:[#allocation2 + $0x12a] sm:$0xff]
      %v917 = vld [vmem:[#allocation2 + $0x13a] sm:$0xff]
      %v918 = vld [vmem:[#allocation2 + $0x142] sm:$0xff]
      %v919 = vld [vmem:[#allocation2 + $0x152] sm:$0xff]
      %v920 = vld [vmem:[#allocation2 + $0x15a] sm:$0xff]
      %v921 = vld [vmem:[#allocation2 + $0x16a] sm:$0xff]
      %v922 = vld [vmem:[#allocation2 + $0x172] sm:$0xff]
      %v923 = vlaneseq
      %v924 = vshrl.u32 %v923, 7
      %v925 = vsub.s32 2, %v924
      %v926 = vrot.slane %v689, %v925
      %v927 = vmul.f32 %v891, %v926
      %v928 = vmul.f32 %v892, %v926
      %v929 = vmul.f32 %v893, %v926
      %v930 = vmul.f32 %v894, %v926
      %v931 = vmul.f32 %v895, %v926
      %v932 = vmul.f32 %v896, %v926
      %v933 = vmul.f32 %v897, %v926
      %v934 = vmul.f32 %v898, %v926
      %v935 = vmul.f32 %v899, %v926
      %v936 = vmul.f32 %v900, %v926
      %v937 = vmul.f32 %v901, %v926
      %v938 = vmul.f32 %v902, %v926
      %v939 = vmul.f32 %v903, %v926
      %v940 = vmul.f32 %v904, %v926
      %v941 = vmul.f32 %v905, %v926
      %v942 = vmul.f32 %v906, %v926
      %v943 = vmul.f32 %v907, %v926
      %v944 = vmul.f32 %v908, %v926
      %v945 = vmul.f32 %v909, %v926
      %v946 = vmul.f32 %v910, %v926
      %v947 = vmul.f32 %v911, %v926
      %v948 = vmul.f32 %v912, %v926
      %v949 = vmul.f32 %v913, %v926
      %v950 = vmul.f32 %v914, %v926
      %v951 = vmul.f32 %v915, %v926
      %v952 = vmul.f32 %v916, %v926
      %v953 = vmul.f32 %v917, %v926
      %v954 = vmul.f32 %v918, %v926
      %v955 = vmul.f32 %v919, %v926
      %v956 = vmul.f32 %v920, %v926
      %v957 = vmul.f32 %v921, %v926
      %v958 = vmul.f32 %v922, %v926
      %v959 = vadd.f32 %v859, %v927
      %v960 = vadd.f32 %v860, %v928
      %v961 = vadd.f32 %v861, %v929
      %v962 = vadd.f32 %v862, %v930
      %v963 = vadd.f32 %v863, %v931
      %v964 = vadd.f32 %v864, %v932
      %v965 = vadd.f32 %v865, %v933
      %v966 = vadd.f32 %v866, %v934
      %v967 = vadd.f32 %v867, %v935
      %v968 = vadd.f32 %v868, %v936
      %v969 = vadd.f32 %v869, %v937
      %v970 = vadd.f32 %v870, %v938
      %v971 = vadd.f32 %v871, %v939
      %v972 = vadd.f32 %v872, %v940
      %v973 = vadd.f32 %v873, %v941
      %v974 = vadd.f32 %v874, %v942
      %v975 = vadd.f32 %v875, %v943
      %v976 = vadd.f32 %v876, %v944
      %v977 = vadd.f32 %v877, %v945
      %v978 = vadd.f32 %v878, %v946
      %v979 = vadd.f32 %v879, %v947
      %v980 = vadd.f32 %v880, %v948
      %v981 = vadd.f32 %v881, %v949
      %v982 = vadd.f32 %v882, %v950
      %v983 = vadd.f32 %v883, %v951
      %v984 = vadd.f32 %v884, %v952
      %v985 = vadd.f32 %v885, %v953
      %v986 = vadd.f32 %v886, %v954
      %v987 = vadd.f32 %v887, %v955
      %v988 = vadd.f32 %v888, %v956
      %v989 = vadd.f32 %v889, %v957
      %v990 = vadd.f32 %v890, %v958
      %v991 = vld [vmem:[%s623] sm:$0xff]
      %v992 = vld [vmem:[%s623 + $0x8] sm:$0xff]
      %v993 = vld [vmem:[%s623 + $0x18] sm:$0xff]
      %v994 = vld [vmem:[%s623 + $0x20] sm:$0xff]
      %v995 = vld [vmem:[%s623 + $0x30] sm:$0xff]
      %v996 = vld [vmem:[%s623 + $0x38] sm:$0xff]
      %v997 = vld [vmem:[%s623 + $0x48] sm:$0xff]
      %v998 = vld [vmem:[%s623 + $0x50] sm:$0xff]
      %v999 = vld [vmem:[%s623 + $0x60] sm:$0xff]
      %v1000 = vld [vmem:[%s623 + $0x68] sm:$0xff]
      %v1001 = vld [vmem:[%s623 + $0x78] sm:$0xff]
      %v1002 = vld [vmem:[%s623 + $0x80] sm:$0xff]
      %v1003 = vld [vmem:[%s623 + $0x90] sm:$0xff]
      %v1004 = vld [vmem:[%s623 + $0x98] sm:$0xff]
      %v1005 = vld [vmem:[%s623 + $0xa8] sm:$0xff]
      %v1006 = vld [vmem:[%s623 + $0xb0] sm:$0xff]
      %v1007 = vld [vmem:[%s623 + $0xc0] sm:$0xff]
      %v1008 = vld [vmem:[%s623 + $0xc8] sm:$0xff]
      %v1009 = vld [vmem:[%s623 + $0xd8] sm:$0xff]
      %v1010 = vld [vmem:[%s623 + $0xe0] sm:$0xff]
      %v1011 = vld [vmem:[%s623 + $0xf0] sm:$0xff]
      %v1012 = vld [vmem:[%s623 + $0xf8] sm:$0xff]
      %v1013 = vld [vmem:[%s623 + $0x108] sm:$0xff]
      %v1014 = vld [vmem:[%s623 + $0x110] sm:$0xff]
      %v1015 = vld [vmem:[%s623 + $0x120] sm:$0xff]
      %v1016 = vld [vmem:[%s623 + $0x128] sm:$0xff]
      %v1017 = vld [vmem:[%s623 + $0x138] sm:$0xff]
      %v1018 = vld [vmem:[%s623 + $0x140] sm:$0xff]
      %v1019 = vld [vmem:[%s623 + $0x150] sm:$0xff]
      %v1020 = vld [vmem:[%s623 + $0x158] sm:$0xff]
      %v1021 = vld [vmem:[%s623 + $0x168] sm:$0xff]
      %v1022 = vld [vmem:[%s623 + $0x170] sm:$0xff]
      %v1023 = vlaneseq
      %v1024 = vshrl.u32 %v1023, 7
      %v1025 = vsub.s32 3, %v1024
      %v1026 = vrot.slane %v689, %v1025
      %v1027 = vmul.f32 %v991, %v1026
      %v1028 = vmul.f32 %v992, %v1026
      %v1029 = vmul.f32 %v993, %v1026
      %v1030 = vmul.f32 %v994, %v1026
      %v1031 = vmul.f32 %v995, %v1026
      %v1032 = vmul.f32 %v996, %v1026
      %v1033 = vmul.f32 %v997, %v1026
      %v1034 = vmul.f32 %v998, %v1026
      %v1035 = vmul.f32 %v999, %v1026
      %v1036 = vmul.f32 %v1000, %v1026
      %v1037 = vmul.f32 %v1001, %v1026
      %v1038 = vmul.f32 %v1002, %v1026
      %v1039 = vmul.f32 %v1003, %v1026
      %v1040 = vmul.f32 %v1004, %v1026
      %v1041 = vmul.f32 %v1005, %v1026
      %v1042 = vmul.f32 %v1006, %v1026
      %v1043 = vmul.f32 %v1007, %v1026
      %v1044 = vmul.f32 %v1008, %v1026
      %v1045 = vmul.f32 %v1009, %v1026
      %v1046 = vmul.f32 %v1010, %v1026
      %v1047 = vmul.f32 %v1011, %v1026
      %v1048 = vmul.f32 %v1012, %v1026
      %v1049 = vmul.f32 %v1013, %v1026
      %v1050 = vmul.f32 %v1014, %v1026
      %v1051 = vmul.f32 %v1015, %v1026
      %v1052 = vmul.f32 %v1016, %v1026
      %v1053 = vmul.f32 %v1017, %v1026
      %v1054 = vmul.f32 %v1018, %v1026
      %v1055 = vmul.f32 %v1019, %v1026
      %v1056 = vmul.f32 %v1020, %v1026
      %v1057 = vmul.f32 %v1021, %v1026
      %v1058 = vmul.f32 %v1022, %v1026
      %v1059 = vadd.f32 %v959, %v1027
      %v1060 = vadd.f32 %v960, %v1028
      %v1061 = vadd.f32 %v961, %v1029
      %v1062 = vadd.f32 %v962, %v1030
      %v1063 = vadd.f32 %v963, %v1031
      %v1064 = vadd.f32 %v964, %v1032
      %v1065 = vadd.f32 %v965, %v1033
      %v1066 = vadd.f32 %v966, %v1034
      %v1067 = vadd.f32 %v967, %v1035
      %v1068 = vadd.f32 %v968, %v1036
      %v1069 = vadd.f32 %v969, %v1037
      %v1070 = vadd.f32 %v970, %v1038
      %v1071 = vadd.f32 %v971, %v1039
      %v1072 = vadd.f32 %v972, %v1040
      %v1073 = vadd.f32 %v973, %v1041
      %v1074 = vadd.f32 %v974, %v1042
      %v1075 = vadd.f32 %v975, %v1043
      %v1076 = vadd.f32 %v976, %v1044
      %v1077 = vadd.f32 %v977, %v1045
      %v1078 = vadd.f32 %v978, %v1046
      %v1079 = vadd.f32 %v979, %v1047
      %v1080 = vadd.f32 %v980, %v1048
      %v1081 = vadd.f32 %v981, %v1049
      %v1082 = vadd.f32 %v982, %v1050
      %v1083 = vadd.f32 %v983, %v1051
      %v1084 = vadd.f32 %v984, %v1052
      %v1085 = vadd.f32 %v985, %v1053
      %v1086 = vadd.f32 %v986, %v1054
      %v1087 = vadd.f32 %v987, %v1055
      %v1088 = vadd.f32 %v988, %v1056
      %v1089 = vadd.f32 %v989, %v1057
      %v1090 = vadd.f32 %v990, %v1058
      %v1091 = vld [vmem:[%s623 + $0x1] sm:$0xff]
      %v1092 = vld [vmem:[%s623 + $0x9] sm:$0xff]
      %v1093 = vld [vmem:[%s623 + $0x19] sm:$0xff]
      %v1094 = vld [vmem:[%s623 + $0x21] sm:$0xff]
      %v1095 = vld [vmem:[%s623 + $0x31] sm:$0xff]
      %v1096 = vld [vmem:[%s623 + $0x39] sm:$0xff]
      %v1097 = vld [vmem:[%s623 + $0x49] sm:$0xff]
      %v1098 = vld [vmem:[%s623 + $0x51] sm:$0xff]
      %v1099 = vld [vmem:[%s623 + $0x61] sm:$0xff]
      %v1100 = vld [vmem:[%s623 + $0x69] sm:$0xff]
      %v1101 = vld [vmem:[%s623 + $0x79] sm:$0xff]
      %v1102 = vld [vmem:[%s623 + $0x81] sm:$0xff]
      %v1103 = vld [vmem:[%s623 + $0x91] sm:$0xff]
      %v1104 = vld [vmem:[%s623 + $0x99] sm:$0xff]
      %v1105 = vld [vmem:[%s623 + $0xa9] sm:$0xff]
      %v1106 = vld [vmem:[%s623 + $0xb1] sm:$0xff]
      %v1107 = vld [vmem:[%s623 + $0xc1] sm:$0xff]
      %v1108 = vld [vmem:[%s623 + $0xc9] sm:$0xff]
      %v1109 = vld [vmem:[%s623 + $0xd9] sm:$0xff]
      %v1110 = vld [vmem:[%s623 + $0xe1] sm:$0xff]
      %v1111 = vld [vmem:[%s623 + $0xf1] sm:$0xff]
      %v1112 = vld [vmem:[%s623 + $0xf9] sm:$0xff]
      %v1113 = vld [vmem:[%s623 + $0x109] sm:$0xff]
      %v1114 = vld [vmem:[%s623 + $0x111] sm:$0xff]
      %v1115 = vld [vmem:[%s623 + $0x121] sm:$0xff]
      %v1116 = vld [vmem:[%s623 + $0x129] sm:$0xff]
      %v1117 = vld [vmem:[%s623 + $0x139] sm:$0xff]
      %v1118 = vld [vmem:[%s623 + $0x141] sm:$0xff]
      %v1119 = vld [vmem:[%s623 + $0x151] sm:$0xff]
      %v1120 = vld [vmem:[%s623 + $0x159] sm:$0xff]
      %v1121 = vld [vmem:[%s623 + $0x169] sm:$0xff]
      %v1122 = vld [vmem:[%s623 + $0x171] sm:$0xff]
      %v1123 = vlaneseq
      %v1124 = vshrl.u32 %v1123, 7
      %v1125 = vsub.s32 4, %v1124
      %v1126 = vrot.slane %v689, %v1125
      %v1127 = vmul.f32 %v1091, %v1126
      %v1128 = vmul.f32 %v1092, %v1126
      %v1129 = vmul.f32 %v1093, %v1126
      %v1130 = vmul.f32 %v1094, %v1126
      %v1131 = vmul.f32 %v1095, %v1126
      %v1132 = vmul.f32 %v1096, %v1126
      %v1133 = vmul.f32 %v1097, %v1126
      %v1134 = vmul.f32 %v1098, %v1126
      %v1135 = vmul.f32 %v1099, %v1126
      %v1136 = vmul.f32 %v1100, %v1126
      %v1137 = vmul.f32 %v1101, %v1126
      %v1138 = vmul.f32 %v1102, %v1126
      %v1139 = vmul.f32 %v1103, %v1126
      %v1140 = vmul.f32 %v1104, %v1126
      %v1141 = vmul.f32 %v1105, %v1126
      %v1142 = vmul.f32 %v1106, %v1126
      %v1143 = vmul.f32 %v1107, %v1126
      %v1144 = vmul.f32 %v1108, %v1126
      %v1145 = vmul.f32 %v1109, %v1126
      %v1146 = vmul.f32 %v1110, %v1126
      %v1147 = vmul.f32 %v1111, %v1126
      %v1148 = vmul.f32 %v1112, %v1126
      %v1149 = vmul.f32 %v1113, %v1126
      %v1150 = vmul.f32 %v1114, %v1126
      %v1151 = vmul.f32 %v1115, %v1126
      %v1152 = vmul.f32 %v1116, %v1126
      %v1153 = vmul.f32 %v1117, %v1126
      %v1154 = vmul.f32 %v1118, %v1126
      %v1155 = vmul.f32 %v1119, %v1126
      %v1156 = vmul.f32 %v1120, %v1126
      %v1157 = vmul.f32 %v1121, %v1126
      %v1158 = vmul.f32 %v1122, %v1126
      %v1159 = vadd.f32 %v1059, %v1127
      %v1160 = vadd.f32 %v1060, %v1128
      %v1161 = vadd.f32 %v1061, %v1129
      %v1162 = vadd.f32 %v1062, %v1130
      %v1163 = vadd.f32 %v1063, %v1131
      %v1164 = vadd.f32 %v1064, %v1132
      %v1165 = vadd.f32 %v1065, %v1133
      %v1166 = vadd.f32 %v1066, %v1134
      %v1167 = vadd.f32 %v1067, %v1135
      %v1168 = vadd.f32 %v1068, %v1136
      %v1169 = vadd.f32 %v1069, %v1137
      %v1170 = vadd.f32 %v1070, %v1138
      %v1171 = vadd.f32 %v1071, %v1139
      %v1172 = vadd.f32 %v1072, %v1140
      %v1173 = vadd.f32 %v1073, %v1141
      %v1174 = vadd.f32 %v1074, %v1142
      %v1175 = vadd.f32 %v1075, %v1143
      %v1176 = vadd.f32 %v1076, %v1144
      %v1177 = vadd.f32 %v1077, %v1145
      %v1178 = vadd.f32 %v1078, %v1146
      %v1179 = vadd.f32 %v1079, %v1147
      %v1180 = vadd.f32 %v1080, %v1148
      %v1181 = vadd.f32 %v1081, %v1149
      %v1182 = vadd.f32 %v1082, %v1150
      %v1183 = vadd.f32 %v1083, %v1151
      %v1184 = vadd.f32 %v1084, %v1152
      %v1185 = vadd.f32 %v1085, %v1153
      %v1186 = vadd.f32 %v1086, %v1154
      %v1187 = vadd.f32 %v1087, %v1155
      %v1188 = vadd.f32 %v1088, %v1156
      %v1189 = vadd.f32 %v1089, %v1157
      %v1190 = vadd.f32 %v1090, %v1158
      %v1191 = vld [vmem:[%s623 + $0x2] sm:$0xff]
      %v1192 = vld [vmem:[%s623 + $0xa] sm:$0xff]
      %v1193 = vld [vmem:[%s623 + $0x1a] sm:$0xff]
      %v1194 = vld [vmem:[%s623 + $0x22] sm:$0xff]
      %v1195 = vld [vmem:[%s623 + $0x32] sm:$0xff]
      %v1196 = vld [vmem:[%s623 + $0x3a] sm:$0xff]
      %v1197 = vld [vmem:[%s623 + $0x4a] sm:$0xff]
      %v1198 = vld [vmem:[%s623 + $0x52] sm:$0xff]
      %v1199 = vld [vmem:[%s623 + $0x62] sm:$0xff]
      %v1200 = vld [vmem:[%s623 + $0x6a] sm:$0xff]
      %v1201 = vld [vmem:[%s623 + $0x7a] sm:$0xff]
      %v1202 = vld [vmem:[%s623 + $0x82] sm:$0xff]
      %v1203 = vld [vmem:[%s623 + $0x92] sm:$0xff]
      %v1204 = vld [vmem:[%s623 + $0x9a] sm:$0xff]
      %v1205 = vld [vmem:[%s623 + $0xaa] sm:$0xff]
      %v1206 = vld [vmem:[%s623 + $0xb2] sm:$0xff]
      %v1207 = vld [vmem:[%s623 + $0xc2] sm:$0xff]
      %v1208 = vld [vmem:[%s623 + $0xca] sm:$0xff]
      %v1209 = vld [vmem:[%s623 + $0xda] sm:$0xff]
      %v1210 = vld [vmem:[%s623 + $0xe2] sm:$0xff]
      %v1211 = vld [vmem:[%s623 + $0xf2] sm:$0xff]
      %v1212 = vld [vmem:[%s623 + $0xfa] sm:$0xff]
      %v1213 = vld [vmem:[%s623 + $0x10a] sm:$0xff]
      %v1214 = vld [vmem:[%s623 + $0x112] sm:$0xff]
      %v1215 = vld [vmem:[%s623 + $0x122] sm:$0xff]
      %v1216 = vld [vmem:[%s623 + $0x12a] sm:$0xff]
      %v1217 = vld [vmem:[%s623 + $0x13a] sm:$0xff]
      %v1218 = vld [vmem:[%s623 + $0x142] sm:$0xff]
      %v1219 = vld [vmem:[%s623 + $0x152] sm:$0xff]
      %v1220 = vld [vmem:[%s623 + $0x15a] sm:$0xff]
      %v1221 = vld [vmem:[%s623 + $0x16a] sm:$0xff]
      %v1222 = vld [vmem:[%s623 + $0x172] sm:$0xff]
      %v1223 = vlaneseq
      %v1224 = vshrl.u32 %v1223, 7
      %v1225 = vsub.s32 5, %v1224
      %v1226 = vrot.slane %v689, %v1225
      %v1227 = vmul.f32 %v1191, %v1226
      %v1228 = vmul.f32 %v1192, %v1226
      %v1229 = vmul.f32 %v1193, %v1226
      %v1230 = vmul.f32 %v1194, %v1226
      %v1231 = vmul.f32 %v1195, %v1226
      %v1232 = vmul.f32 %v1196, %v1226
      %v1233 = vmul.f32 %v1197, %v1226
      %v1234 = vmul.f32 %v1198, %v1226
      %v1235 = vmul.f32 %v1199, %v1226
      %v1236 = vmul.f32 %v1200, %v1226
      %v1237 = vmul.f32 %v1201, %v1226
      %v1238 = vmul.f32 %v1202, %v1226
      %v1239 = vmul.f32 %v1203, %v1226
      %v1240 = vmul.f32 %v1204, %v1226
      %v1241 = vmul.f32 %v1205, %v1226
      %v1242 = vmul.f32 %v1206, %v1226
      %v1243 = vmul.f32 %v1207, %v1226
      %v1244 = vmul.f32 %v1208, %v1226
      %v1245 = vmul.f32 %v1209, %v1226
      %v1246 = vmul.f32 %v1210, %v1226
      %v1247 = vmul.f32 %v1211, %v1226
      %v1248 = vmul.f32 %v1212, %v1226
      %v1249 = vmul.f32 %v1213, %v1226
      %v1250 = vmul.f32 %v1214, %v1226
      %v1251 = vmul.f32 %v1215, %v1226
      %v1252 = vmul.f32 %v1216, %v1226
      %v1253 = vmul.f32 %v1217, %v1226
      %v1254 = vmul.f32 %v1218, %v1226
      %v1255 = vmul.f32 %v1219, %v1226
      %v1256 = vmul.f32 %v1220, %v1226
      %v1257 = vmul.f32 %v1221, %v1226
      %v1258 = vmul.f32 %v1222, %v1226
      %v1259 = vadd.f32 %v1159, %v1227
      %v1260 = vadd.f32 %v1160, %v1228
      %v1261 = vadd.f32 %v1161, %v1229
      %v1262 = vadd.f32 %v1162, %v1230
      %v1263 = vadd.f32 %v1163, %v1231
      %v1264 = vadd.f32 %v1164, %v1232
      %v1265 = vadd.f32 %v1165, %v1233
      %v1266 = vadd.f32 %v1166, %v1234
      %v1267 = vadd.f32 %v1167, %v1235
      %v1268 = vadd.f32 %v1168, %v1236
      %v1269 = vadd.f32 %v1169, %v1237
      %v1270 = vadd.f32 %v1170, %v1238
      %v1271 = vadd.f32 %v1171, %v1239
      %v1272 = vadd.f32 %v1172, %v1240
      %v1273 = vadd.f32 %v1173, %v1241
      %v1274 = vadd.f32 %v1174, %v1242
      %v1275 = vadd.f32 %v1175, %v1243
      %v1276 = vadd.f32 %v1176, %v1244
      %v1277 = vadd.f32 %v1177, %v1245
      %v1278 = vadd.f32 %v1178, %v1246
      %v1279 = vadd.f32 %v1179, %v1247
      %v1280 = vadd.f32 %v1180, %v1248
      %v1281 = vadd.f32 %v1181, %v1249
      %v1282 = vadd.f32 %v1182, %v1250
      %v1283 = vadd.f32 %v1183, %v1251
      %v1284 = vadd.f32 %v1184, %v1252
      %v1285 = vadd.f32 %v1185, %v1253
      %v1286 = vadd.f32 %v1186, %v1254
      %v1287 = vadd.f32 %v1187, %v1255
      %v1288 = vadd.f32 %v1188, %v1256
      %v1289 = vadd.f32 %v1189, %v1257
      %v1290 = vadd.f32 %v1190, %v1258
      %s1291 = scalar_lea.vmem [#allocation2], 48
      %v1292 = vld [vmem:[%s1291] sm:$0xff]
      %v1293 = vld [vmem:[%s1291 + $0x8] sm:$0xff]
      %v1294 = vld [vmem:[%s1291 + $0x18] sm:$0xff]
      %v1295 = vld [vmem:[%s1291 + $0x20] sm:$0xff]
      %v1296 = vld [vmem:[%s1291 + $0x30] sm:$0xff]
      %v1297 = vld [vmem:[%s1291 + $0x38] sm:$0xff]
      %v1298 = vld [vmem:[%s1291 + $0x48] sm:$0xff]
      %v1299 = vld [vmem:[%s1291 + $0x50] sm:$0xff]
      %v1300 = vld [vmem:[%s1291 + $0x60] sm:$0xff]
      %v1301 = vld [vmem:[%s1291 + $0x68] sm:$0xff]
      %v1302 = vld [vmem:[%s1291 + $0x78] sm:$0xff]
      %v1303 = vld [vmem:[%s1291 + $0x80] sm:$0xff]
      %v1304 = vld [vmem:[%s1291 + $0x90] sm:$0xff]
      %v1305 = vld [vmem:[%s1291 + $0x98] sm:$0xff]
      %v1306 = vld [vmem:[%s1291 + $0xa8] sm:$0xff]
      %v1307 = vld [vmem:[%s1291 + $0xb0] sm:$0xff]
      %v1308 = vld [vmem:[%s1291 + $0xc0] sm:$0xff]
      %v1309 = vld [vmem:[%s1291 + $0xc8] sm:$0xff]
      %v1310 = vld [vmem:[%s1291 + $0xd8] sm:$0xff]
      %v1311 = vld [vmem:[%s1291 + $0xe0] sm:$0xff]
      %v1312 = vld [vmem:[%s1291 + $0xf0] sm:$0xff]
      %v1313 = vld [vmem:[%s1291 + $0xf8] sm:$0xff]
      %v1314 = vld [vmem:[%s1291 + $0x108] sm:$0xff]
      %v1315 = vld [vmem:[%s1291 + $0x110] sm:$0xff]
      %v1316 = vld [vmem:[%s1291 + $0x120] sm:$0xff]
      %v1317 = vld [vmem:[%s1291 + $0x128] sm:$0xff]
      %v1318 = vld [vmem:[%s1291 + $0x138] sm:$0xff]
      %v1319 = vld [vmem:[%s1291 + $0x140] sm:$0xff]
      %v1320 = vld [vmem:[%s1291 + $0x150] sm:$0xff]
      %v1321 = vld [vmem:[%s1291 + $0x158] sm:$0xff]
      %v1322 = vld [vmem:[%s1291 + $0x168] sm:$0xff]
      %v1323 = vld [vmem:[%s1291 + $0x170] sm:$0xff]
      %v1324 = vlaneseq
      %v1325 = vshrl.u32 %v1324, 7
      %v1326 = vsub.s32 6, %v1325
      %v1327 = vrot.slane %v689, %v1326
      %v1328 = vmul.f32 %v1292, %v1327
      %v1329 = vmul.f32 %v1293, %v1327
      %v1330 = vmul.f32 %v1294, %v1327
      %v1331 = vmul.f32 %v1295, %v1327
      %v1332 = vmul.f32 %v1296, %v1327
      %v1333 = vmul.f32 %v1297, %v1327
      %v1334 = vmul.f32 %v1298, %v1327
      %v1335 = vmul.f32 %v1299, %v1327
      %v1336 = vmul.f32 %v1300, %v1327
      %v1337 = vmul.f32 %v1301, %v1327
      %v1338 = vmul.f32 %v1302, %v1327
      %v1339 = vmul.f32 %v1303, %v1327
      %v1340 = vmul.f32 %v1304, %v1327
      %v1341 = vmul.f32 %v1305, %v1327
      %v1342 = vmul.f32 %v1306, %v1327
      %v1343 = vmul.f32 %v1307, %v1327
      %v1344 = vmul.f32 %v1308, %v1327
      %v1345 = vmul.f32 %v1309, %v1327
      %v1346 = vmul.f32 %v1310, %v1327
      %v1347 = vmul.f32 %v1311, %v1327
      %v1348 = vmul.f32 %v1312, %v1327
      %v1349 = vmul.f32 %v1313, %v1327
      %v1350 = vmul.f32 %v1314, %v1327
      %v1351 = vmul.f32 %v1315, %v1327
      %v1352 = vmul.f32 %v1316, %v1327
      %v1353 = vmul.f32 %v1317, %v1327
      %v1354 = vmul.f32 %v1318, %v1327
      %v1355 = vmul.f32 %v1319, %v1327
      %v1356 = vmul.f32 %v1320, %v1327
      %v1357 = vmul.f32 %v1321, %v1327
      %v1358 = vmul.f32 %v1322, %v1327
      %v1359 = vmul.f32 %v1323, %v1327
      %v1360 = vadd.f32 %v1259, %v1328
      %v1361 = vadd.f32 %v1260, %v1329
      %v1362 = vadd.f32 %v1261, %v1330
      %v1363 = vadd.f32 %v1262, %v1331
      %v1364 = vadd.f32 %v1263, %v1332
      %v1365 = vadd.f32 %v1264, %v1333
      %v1366 = vadd.f32 %v1265, %v1334
      %v1367 = vadd.f32 %v1266, %v1335
      %v1368 = vadd.f32 %v1267, %v1336
      %v1369 = vadd.f32 %v1268, %v1337
      %v1370 = vadd.f32 %v1269, %v1338
      %v1371 = vadd.f32 %v1270, %v1339
      %v1372 = vadd.f32 %v1271, %v1340
      %v1373 = vadd.f32 %v1272, %v1341
      %v1374 = vadd.f32 %v1273, %v1342
      %v1375 = vadd.f32 %v1274, %v1343
      %v1376 = vadd.f32 %v1275, %v1344
      %v1377 = vadd.f32 %v1276, %v1345
      %v1378 = vadd.f32 %v1277, %v1346
      %v1379 = vadd.f32 %v1278, %v1347
      %v1380 = vadd.f32 %v1279, %v1348
      %v1381 = vadd.f32 %v1280, %v1349
      %v1382 = vadd.f32 %v1281, %v1350
      %v1383 = vadd.f32 %v1282, %v1351
      %v1384 = vadd.f32 %v1283, %v1352
      %v1385 = vadd.f32 %v1284, %v1353
      %v1386 = vadd.f32 %v1285, %v1354
      %v1387 = vadd.f32 %v1286, %v1355
      %v1388 = vadd.f32 %v1287, %v1356
      %v1389 = vadd.f32 %v1288, %v1357
      %v1390 = vadd.f32 %v1289, %v1358
      %v1391 = vadd.f32 %v1290, %v1359
      %v1392 = vld [vmem:[%s1291 + $0x1] sm:$0xff]
      %v1393 = vld [vmem:[%s1291 + $0x9] sm:$0xff]
      %v1394 = vld [vmem:[%s1291 + $0x19] sm:$0xff]
      %v1395 = vld [vmem:[%s1291 + $0x21] sm:$0xff]
      %v1396 = vld [vmem:[%s1291 + $0x31] sm:$0xff]
      %v1397 = vld [vmem:[%s1291 + $0x39] sm:$0xff]
      %v1398 = vld [vmem:[%s1291 + $0x49] sm:$0xff]
      %v1399 = vld [vmem:[%s1291 + $0x51] sm:$0xff]
      %v1400 = vld [vmem:[%s1291 + $0x61] sm:$0xff]
      %v1401 = vld [vmem:[%s1291 + $0x69] sm:$0xff]
      %v1402 = vld [vmem:[%s1291 + $0x79] sm:$0xff]
      %v1403 = vld [vmem:[%s1291 + $0x81] sm:$0xff]
      %v1404 = vld [vmem:[%s1291 + $0x91] sm:$0xff]
      %v1405 = vld [vmem:[%s1291 + $0x99] sm:$0xff]
      %v1406 = vld [vmem:[%s1291 + $0xa9] sm:$0xff]
      %v1407 = vld [vmem:[%s1291 + $0xb1] sm:$0xff]
      %v1408 = vld [vmem:[%s1291 + $0xc1] sm:$0xff]
      %v1409 = vld [vmem:[%s1291 + $0xc9] sm:$0xff]
      %v1410 = vld [vmem:[%s1291 + $0xd9] sm:$0xff]
      %v1411 = vld [vmem:[%s1291 + $0xe1] sm:$0xff]
      %v1412 = vld [vmem:[%s1291 + $0xf1] sm:$0xff]
      %v1413 = vld [vmem:[%s1291 + $0xf9] sm:$0xff]
      %v1414 = vld [vmem:[%s1291 + $0x109] sm:$0xff]
      %v1415 = vld [vmem:[%s1291 + $0x111] sm:$0xff]
      %v1416 = vld [vmem:[%s1291 + $0x121] sm:$0xff]
      %v1417 = vld [vmem:[%s1291 + $0x129] sm:$0xff]
      %v1418 = vld [vmem:[%s1291 + $0x139] sm:$0xff]
      %v1419 = vld [vmem:[%s1291 + $0x141] sm:$0xff]
      %v1420 = vld [vmem:[%s1291 + $0x151] sm:$0xff]
      %v1421 = vld [vmem:[%s1291 + $0x159] sm:$0xff]
      %v1422 = vld [vmem:[%s1291 + $0x169] sm:$0xff]
      %v1423 = vld [vmem:[%s1291 + $0x171] sm:$0xff]
      %v1424 = vlaneseq
      %v1425 = vshrl.u32 %v1424, 7
      %v1426 = vsub.s32 7, %v1425
      %v1427 = vrot.slane %v689, %v1426
      %v1428 = vmul.f32 %v1392, %v1427
      %v1429 = vmul.f32 %v1393, %v1427
      %v1430 = vmul.f32 %v1394, %v1427
      %v1431 = vmul.f32 %v1395, %v1427
      %v1432 = vmul.f32 %v1396, %v1427
      %v1433 = vmul.f32 %v1397, %v1427
      %v1434 = vmul.f32 %v1398, %v1427
      %v1435 = vmul.f32 %v1399, %v1427
      %v1436 = vmul.f32 %v1400, %v1427
      %v1437 = vmul.f32 %v1401, %v1427
      %v1438 = vmul.f32 %v1402, %v1427
      %v1439 = vmul.f32 %v1403, %v1427
      %v1440 = vmul.f32 %v1404, %v1427
      %v1441 = vmul.f32 %v1405, %v1427
      %v1442 = vmul.f32 %v1406, %v1427
      %v1443 = vmul.f32 %v1407, %v1427
      %v1444 = vmul.f32 %v1408, %v1427
      %v1445 = vmul.f32 %v1409, %v1427
      %v1446 = vmul.f32 %v1410, %v1427
      %v1447 = vmul.f32 %v1411, %v1427
      %v1448 = vmul.f32 %v1412, %v1427
      %v1449 = vmul.f32 %v1413, %v1427
      %v1450 = vmul.f32 %v1414, %v1427
      %v1451 = vmul.f32 %v1415, %v1427
      %v1452 = vmul.f32 %v1416, %v1427
      %v1453 = vmul.f32 %v1417, %v1427
      %v1454 = vmul.f32 %v1418, %v1427
      %v1455 = vmul.f32 %v1419, %v1427
      %v1456 = vmul.f32 %v1420, %v1427
      %v1457 = vmul.f32 %v1421, %v1427
      %v1458 = vmul.f32 %v1422, %v1427
      %v1459 = vmul.f32 %v1423, %v1427
      %v1460 = vadd.f32 %v1360, %v1428
      %v1461 = vadd.f32 %v1361, %v1429
      %v1462 = vadd.f32 %v1362, %v1430
      %v1463 = vadd.f32 %v1363, %v1431
      %v1464 = vadd.f32 %v1364, %v1432
      %v1465 = vadd.f32 %v1365, %v1433
      %v1466 = vadd.f32 %v1366, %v1434
      %v1467 = vadd.f32 %v1367, %v1435
      %v1468 = vadd.f32 %v1368, %v1436
      %v1469 = vadd.f32 %v1369, %v1437
      %v1470 = vadd.f32 %v1370, %v1438
      %v1471 = vadd.f32 %v1371, %v1439
      %v1472 = vadd.f32 %v1372, %v1440
      %v1473 = vadd.f32 %v1373, %v1441
      %v1474 = vadd.f32 %v1374, %v1442
      %v1475 = vadd.f32 %v1375, %v1443
      %v1476 = vadd.f32 %v1376, %v1444
      %v1477 = vadd.f32 %v1377, %v1445
      %v1478 = vadd.f32 %v1378, %v1446
      %v1479 = vadd.f32 %v1379, %v1447
      %v1480 = vadd.f32 %v1380, %v1448
      %v1481 = vadd.f32 %v1381, %v1449
      %v1482 = vadd.f32 %v1382, %v1450
      %v1483 = vadd.f32 %v1383, %v1451
      %v1484 = vadd.f32 %v1384, %v1452
      %v1485 = vadd.f32 %v1385, %v1453
      %v1486 = vadd.f32 %v1386, %v1454
      %v1487 = vadd.f32 %v1387, %v1455
      %v1488 = vadd.f32 %v1388, %v1456
      %v1489 = vadd.f32 %v1389, %v1457
      %v1490 = vadd.f32 %v1390, %v1458
      %v1491 = vadd.f32 %v1391, %v1459
      %v1492 = vld [vmem:[%s1291 + $0x2] sm:$0xff]
      %v1493 = vld [vmem:[%s1291 + $0xa] sm:$0xff]
      %v1494 = vld [vmem:[%s1291 + $0x1a] sm:$0xff]
      %v1495 = vld [vmem:[%s1291 + $0x22] sm:$0xff]
      %v1496 = vld [vmem:[%s1291 + $0x32] sm:$0xff]
      %v1497 = vld [vmem:[%s1291 + $0x3a] sm:$0xff]
      %v1498 = vld [vmem:[%s1291 + $0x4a] sm:$0xff]
      %v1499 = vld [vmem:[%s1291 + $0x52] sm:$0xff]
      %v1500 = vld [vmem:[%s1291 + $0x62] sm:$0xff]
      %v1501 = vld [vmem:[%s1291 + $0x6a] sm:$0xff]
      %v1502 = vld [vmem:[%s1291 + $0x7a] sm:$0xff]
      %v1503 = vld [vmem:[%s1291 + $0x82] sm:$0xff]
      %v1504 = vld [vmem:[%s1291 + $0x92] sm:$0xff]
      %v1505 = vld [vmem:[%s1291 + $0x9a] sm:$0xff]
      %v1506 = vld [vmem:[%s1291 + $0xaa] sm:$0xff]
      %v1507 = vld [vmem:[%s1291 + $0xb2] sm:$0xff]
      %v1508 = vld [vmem:[%s1291 + $0xc2] sm:$0xff]
      %v1509 = vld [vmem:[%s1291 + $0xca] sm:$0xff]
      %v1510 = vld [vmem:[%s1291 + $0xda] sm:$0xff]
      %v1511 = vld [vmem:[%s1291 + $0xe2] sm:$0xff]
      %v1512 = vld [vmem:[%s1291 + $0xf2] sm:$0xff]
      %v1513 = vld [vmem:[%s1291 + $0xfa] sm:$0xff]
      %v1514 = vld [vmem:[%s1291 + $0x10a] sm:$0xff]
      %v1515 = vld [vmem:[%s1291 + $0x112] sm:$0xff]
      %v1516 = vld [vmem:[%s1291 + $0x122] sm:$0xff]
      %v1517 = vld [vmem:[%s1291 + $0x12a] sm:$0xff]
      %v1518 = vld [vmem:[%s1291 + $0x13a] sm:$0xff]
      %v1519 = vld [vmem:[%s1291 + $0x142] sm:$0xff]
      %v1520 = vld [vmem:[%s1291 + $0x152] sm:$0xff]
      %v1521 = vld [vmem:[%s1291 + $0x15a] sm:$0xff]
      %v1522 = vld [vmem:[%s1291 + $0x16a] sm:$0xff]
      %v1523 = vld [vmem:[%s1291 + $0x172] sm:$0xff]
      %v1524 = vlaneseq
      %v1525 = vshrl.u32 %v1524, 7
      %v1526 = vsub.s32 0, %v1525
      %v1527 = vrot.slane %v690, %v1526
      %v1528 = vmul.f32 %v1492, %v1527
      %v1529 = vmul.f32 %v1493, %v1527
      %v1530 = vmul.f32 %v1494, %v1527
      %v1531 = vmul.f32 %v1495, %v1527
      %v1532 = vmul.f32 %v1496, %v1527
      %v1533 = vmul.f32 %v1497, %v1527
      %v1534 = vmul.f32 %v1498, %v1527
      %v1535 = vmul.f32 %v1499, %v1527
      %v1536 = vmul.f32 %v1500, %v1527
      %v1537 = vmul.f32 %v1501, %v1527
      %v1538 = vmul.f32 %v1502, %v1527
      %v1539 = vmul.f32 %v1503, %v1527
      %v1540 = vmul.f32 %v1504, %v1527
      %v1541 = vmul.f32 %v1505, %v1527
      %v1542 = vmul.f32 %v1506, %v1527
      %v1543 = vmul.f32 %v1507, %v1527
      %v1544 = vmul.f32 %v1508, %v1527
      %v1545 = vmul.f32 %v1509, %v1527
      %v1546 = vmul.f32 %v1510, %v1527
      %v1547 = vmul.f32 %v1511, %v1527
      %v1548 = vmul.f32 %v1512, %v1527
      %v1549 = vmul.f32 %v1513, %v1527
      %v1550 = vmul.f32 %v1514, %v1527
      %v1551 = vmul.f32 %v1515, %v1527
      %v1552 = vmul.f32 %v1516, %v1527
      %v1553 = vmul.f32 %v1517, %v1527
      %v1554 = vmul.f32 %v1518, %v1527
      %v1555 = vmul.f32 %v1519, %v1527
      %v1556 = vmul.f32 %v1520, %v1527
      %v1557 = vmul.f32 %v1521, %v1527
      %v1558 = vmul.f32 %v1522, %v1527
      %v1559 = vmul.f32 %v1523, %v1527
      %v1560 = vadd.f32 %v1460, %v1528
      %v1561 = vadd.f32 %v1461, %v1529
      %v1562 = vadd.f32 %v1462, %v1530
      %v1563 = vadd.f32 %v1463, %v1531
      %v1564 = vadd.f32 %v1464, %v1532
      %v1565 = vadd.f32 %v1465, %v1533
      %v1566 = vadd.f32 %v1466, %v1534
      %v1567 = vadd.f32 %v1467, %v1535
      %v1568 = vadd.f32 %v1468, %v1536
      %v1569 = vadd.f32 %v1469, %v1537
      %v1570 = vadd.f32 %v1470, %v1538
      %v1571 = vadd.f32 %v1471, %v1539
      %v1572 = vadd.f32 %v1472, %v1540
      %v1573 = vadd.f32 %v1473, %v1541
      %v1574 = vadd.f32 %v1474, %v1542
      %v1575 = vadd.f32 %v1475, %v1543
      %v1576 = vadd.f32 %v1476, %v1544
      %v1577 = vadd.f32 %v1477, %v1545
      %v1578 = vadd.f32 %v1478, %v1546
      %v1579 = vadd.f32 %v1479, %v1547
      %v1580 = vadd.f32 %v1480, %v1548
      %v1581 = vadd.f32 %v1481, %v1549
      %v1582 = vadd.f32 %v1482, %v1550
      %v1583 = vadd.f32 %v1483, %v1551
      %v1584 = vadd.f32 %v1484, %v1552
      %v1585 = vadd.f32 %v1485, %v1553
      %v1586 = vadd.f32 %v1486, %v1554
      %v1587 = vadd.f32 %v1487, %v1555
      %v1588 = vadd.f32 %v1488, %v1556
      %v1589 = vadd.f32 %v1489, %v1557
      %v1590 = vadd.f32 %v1490, %v1558
      %v1591 = vadd.f32 %v1491, %v1559
      %v1592 = vld [vmem:[%s4] sm:$0x1]
      %v1594 = vlaneseq
      %v1595 = vshrl.u32 %v1594, 7
      %v1596 = vsub.s32 0, %v1595
      %v1597 = vrot.slane %v1592, %v1596
      %v1599 = vadd.f32 %v1560, %v1597
      %v1600 = vadd.f32 %v1561, %v1597
      %v1601 = vadd.f32 %v1562, %v1597
      %v1602 = vadd.f32 %v1563, %v1597
      %v1603 = vadd.f32 %v1564, %v1597
      %v1604 = vadd.f32 %v1565, %v1597
      %v1605 = vadd.f32 %v1566, %v1597
      %v1606 = vadd.f32 %v1567, %v1597
      %v1607 = vadd.f32 %v1568, %v1597
      %v1608 = vadd.f32 %v1569, %v1597
      %v1609 = vadd.f32 %v1570, %v1597
      %v1610 = vadd.f32 %v1571, %v1597
      %v1611 = vadd.f32 %v1572, %v1597
      %v1612 = vadd.f32 %v1573, %v1597
      %v1613 = vadd.f32 %v1574, %v1597
      %v1614 = vadd.f32 %v1575, %v1597
      %v1615 = vadd.f32 %v1576, %v1597
      %v1616 = vadd.f32 %v1577, %v1597
      %v1617 = vadd.f32 %v1578, %v1597
      %v1618 = vadd.f32 %v1579, %v1597
      %v1619 = vadd.f32 %v1580, %v1597
      %v1620 = vadd.f32 %v1581, %v1597
      %v1621 = vadd.f32 %v1582, %v1597
      %v1622 = vadd.f32 %v1583, %v1597
      %v1623 = vadd.f32 %v1584, %v1597
      %v1624 = vadd.f32 %v1585, %v1597
      %v1625 = vadd.f32 %v1586, %v1597
      %v1626 = vadd.f32 %v1587, %v1597
      %v1627 = vadd.f32 %v1588, %v1597
      %v1628 = vadd.f32 %v1589, %v1597
      %v1629 = vadd.f32 %v1590, %v1597
      %v1630 = vadd.f32 %v1591, %v1597
      %v1631 = vmax.f32 %v1599, 0.0
      %v1632 = vmax.f32 %v1600, 0.0
      %v1633 = vmax.f32 %v1601, 0.0
      %v1634 = vmax.f32 %v1602, 0.0
      %v1635 = vmax.f32 %v1603, 0.0
      %v1636 = vmax.f32 %v1604, 0.0
      %v1637 = vmax.f32 %v1605, 0.0
      %v1638 = vmax.f32 %v1606, 0.0
      %v1639 = vmax.f32 %v1607, 0.0
      %v1640 = vmax.f32 %v1608, 0.0
      %v1641 = vmax.f32 %v1609, 0.0
      %v1642 = vmax.f32 %v1610, 0.0
      %v1643 = vmax.f32 %v1611, 0.0
      %v1644 = vmax.f32 %v1612, 0.0
      %v1645 = vmax.f32 %v1613, 0.0
      %v1646 = vmax.f32 %v1614, 0.0
      %v1647 = vmax.f32 %v1615, 0.0
      %v1648 = vmax.f32 %v1616, 0.0
      %v1649 = vmax.f32 %v1617, 0.0
      %v1650 = vmax.f32 %v1618, 0.0
      %v1651 = vmax.f32 %v1619, 0.0
      %v1652 = vmax.f32 %v1620, 0.0
      %v1653 = vmax.f32 %v1621, 0.0
      %v1654 = vmax.f32 %v1622, 0.0
      %v1655 = vmax.f32 %v1623, 0.0
      %v1656 = vmax.f32 %v1624, 0.0
      %v1657 = vmax.f32 %v1625, 0.0
      %v1658 = vmax.f32 %v1626, 0.0
      %v1659 = vmax.f32 %v1627, 0.0
      %v1660 = vmax.f32 %v1628, 0.0
      %v1661 = vmax.f32 %v1629, 0.0
      %v1662 = vmax.f32 %v1630, 0.0
      %v1663 = vmin.f32 %v1631, 6.0
      %v1664 = vmin.f32 %v1632, 6.0
      %v1665 = vmin.f32 %v1633, 6.0
      %v1666 = vmin.f32 %v1634, 6.0
      %v1667 = vmin.f32 %v1635, 6.0
      %v1668 = vmin.f32 %v1636, 6.0
      %v1669 = vmin.f32 %v1637, 6.0
      %v1670 = vmin.f32 %v1638, 6.0
      %v1671 = vmin.f32 %v1639, 6.0
      %v1672 = vmin.f32 %v1640, 6.0
      %v1673 = vmin.f32 %v1641, 6.0
      %v1674 = vmin.f32 %v1642, 6.0
      %v1675 = vmin.f32 %v1643, 6.0
      %v1676 = vmin.f32 %v1644, 6.0
      %v1677 = vmin.f32 %v1645, 6.0
      %v1678 = vmin.f32 %v1646, 6.0
      %v1679 = vmin.f32 %v1647, 6.0
      %v1680 = vmin.f32 %v1648, 6.0
      %v1681 = vmin.f32 %v1649, 6.0
      %v1682 = vmin.f32 %v1650, 6.0
      %v1683 = vmin.f32 %v1651, 6.0
      %v1684 = vmin.f32 %v1652, 6.0
      %v1685 = vmin.f32 %v1653, 6.0
      %v1686 = vmin.f32 %v1654, 6.0
      %v1687 = vmin.f32 %v1655, 6.0
      %v1688 = vmin.f32 %v1656, 6.0
      %v1689 = vmin.f32 %v1657, 6.0
      %v1690 = vmin.f32 %v1658, 6.0
      %v1691 = vmin.f32 %v1659, 6.0
      %v1692 = vmin.f32 %v1660, 6.0
      %v1693 = vmin.f32 %v1661, 6.0
      %v1694 = vmin.f32 %v1662, 6.0
      %v1695 = vpack.c.bf16 %v1664, %v1663
      %v1696 = vpack.c.bf16 %v1666, %v1665
      %v1697 = vpack.c.bf16 %v1668, %v1667
      %v1698 = vpack.c.bf16 %v1670, %v1669
      %v1699 = vpack.c.bf16 %v1672, %v1671
      %v1700 = vpack.c.bf16 %v1674, %v1673
      %v1701 = vpack.c.bf16 %v1676, %v1675
      %v1702 = vpack.c.bf16 %v1678, %v1677
      %v1703 = vpack.c.bf16 %v1680, %v1679
      %v1704 = vpack.c.bf16 %v1682, %v1681
      %v1705 = vpack.c.bf16 %v1684, %v1683
      %v1706 = vpack.c.bf16 %v1686, %v1685
      %v1707 = vpack.c.bf16 %v1688, %v1687
      %v1708 = vpack.c.bf16 %v1690, %v1689
      %v1709 = vpack.c.bf16 %v1692, %v1691
      %v1710 = vpack.c.bf16 %v1694, %v1693
      %v1711 = vld [vmem:[%s5] sm:$0xf]
      %v1712 = vld [vmem:[%s5 + $0x4] sm:$0xf]
      %v1713 = vld [vmem:[%s6] sm:$0x1]
      %v1715 = vlaneseq
      %v1716 = vshrl.u32 %v1715, 7
      %v1717 = vsub.s32 0, %v1716
      %v1718 = vrot.slane %v1713, %v1717
      %v1722 = vunpack.c.l.b16 %v1711
      %v1723 = vunpack.c.l.b16 %v1712
      %v1724 = vpack.c.b16 %v1723, %v1722
      %v1727 = vsel %vm614, %v1695, 0
      %v1730 = vsel %vm614, %v1696, 0
      %v1733 = vsel %vm614, %v1697, 0
      %v1736 = vsel %vm614, %v1698, 0
      %v1739 = vsel %vm614, %v1699, 0
      %v1742 = vsel %vm614, %v1700, 0
      %v1745 = vsel %vm614, %v1701, 0
      %v1748 = vsel %vm614, %v1702, 0
      %v1751 = vsel %vm614, %v1703, 0
      %v1754 = vsel %vm614, %v1704, 0
      %v1757 = vsel %vm614, %v1705, 0
      %v1760 = vsel %vm614, %v1706, 0
      %v1763 = vsel %vm614, %v1707, 0
      %v1766 = vsel %vm614, %v1708, 0
      %v1769 = vsel %vm614, %v1709, 0
      %v1772 = vsel %vm614, %v1710, 0
      %1774 = vmatprep.subr.bf16.mxu0 0
      %1775 = vmatpush1.bf16.msra.mxu0 %v1724
      %1776 = vmatprep.subr.bf16.mxu0 0
      %1777 = vmatpush1.bf16.msra.mxu0 0
      %1778 = vmatprep.subr.bf16.mxu0 0
      %1779 = vmatpush1.bf16.msra.mxu0 0
      %1780 = vmatprep.subr.bf16.mxu0 0
      %1781 = vmatpush1.bf16.msra.mxu0 0
      %1782 = vmatprep.subr.bf16.mxu0 0
      %1783 = vmatpush1.bf16.msra.mxu0 0
      %1784 = vmatprep.subr.bf16.mxu0 0
      %1785 = vmatpush1.bf16.msra.mxu0 0
      %1786 = vmatprep.subr.bf16.mxu0 0
      %1787 = vmatpush1.bf16.msra.mxu0 0
      %1788 = vmatprep.subr.bf16.mxu0 0
      %1789 = vmatpush1.bf16.msra.mxu0 0
      %1790 = vmatprep.subr.bf16.mxu0 0
      %1791 = vmatpush1.bf16.msra.mxu0 0
      %1792 = vmatprep.subr.bf16.mxu0 0
      %1793 = vmatpush1.bf16.msra.mxu0 0
      %1794 = vmatprep.subr.bf16.mxu0 0
      %1795 = vmatpush1.bf16.msra.mxu0 0
      %1796 = vmatprep.subr.bf16.mxu0 0
      %1797 = vmatpush1.bf16.msra.mxu0 0
      %1798 = vmatprep.subr.bf16.mxu0 0
      %1799 = vmatpush1.bf16.msra.mxu0 0
      %1800 = vmatprep.subr.bf16.mxu0 0
      %1801 = vmatpush1.bf16.msra.mxu0 0
      %1802 = vmatprep.subr.bf16.mxu0 0
      %1803 = vmatpush1.bf16.msra.mxu0 0
      %1804 = vmatprep.subr.bf16.mxu0 0
      %1805 = vmatpush1.bf16.msra.mxu0 0
      %1806 = vmatprep.mubr.bf16.mxu0 0
      %1807 = vmatmul.mubr.bf16.gmra.mrb[0].mxu0 %v1727
      %v1808 = vpop.f32.mrb[0].mxu0
      %v1809 = vadd.f32 %v1718, %v1808
      %v1810 = vpop.f32.mrb[0].mxu0
      %v1811 = vpop.f32.mrb[0].mxu0
      %v1812 = vadd.f32 %v1718, %v1811
      %v1813 = vpop.f32.mrb[0].mxu0
      %1814 = vmatprep.mubr.bf16.mxu0 0
      %1815 = vmatmul.mubr.bf16.gmra.mrb[0].mxu0 %v1730
      %v1816 = vpop.f32.mrb[0].mxu0
      %v1817 = vadd.f32 %v1718, %v1816
      %v1818 = vpop.f32.mrb[0].mxu0
      %v1819 = vpop.f32.mrb[0].mxu0
      %v1820 = vadd.f32 %v1718, %v1819
      %v1821 = vpop.f32.mrb[0].mxu0
      %1822 = vmatprep.mubr.bf16.mxu0 0
      %1823 = vmatmul.mubr.bf16.gmra.mrb[0].mxu0 %v1733
      %v1824 = vpop.f32.mrb[0].mxu0
      %v1825 = vadd.f32 %v1718, %v1824
      %v1826 = vpop.f32.mrb[0].mxu0
      %v1827 = vpop.f32.mrb[0].mxu0
      %v1828 = vadd.f32 %v1718, %v1827
      %v1829 = vpop.f32.mrb[0].mxu0
      %1830 = vmatprep.mubr.bf16.mxu0 0
      %1831 = vmatmul.mubr.bf16.gmra.mrb[0].mxu0 %v1736
      %v1832 = vpop.f32.mrb[0].mxu0
      %v1833 = vadd.f32 %v1718, %v1832
      %v1834 = vpop.f32.mrb[0].mxu0
      %v1835 = vpop.f32.mrb[0].mxu0
      %v1836 = vadd.f32 %v1718, %v1835
      %v1837 = vpop.f32.mrb[0].mxu0
      %1838 = vmatprep.mubr.bf16.mxu0 0
      %1839 = vmatmul.mubr.bf16.gmra.mrb[0].mxu0 %v1739
      %v1840 = vpop.f32.mrb[0].mxu0
      %v1841 = vadd.f32 %v1718, %v1840
      %v1842 = vpop.f32.mrb[0].mxu0
      %v1843 = vpop.f32.mrb[0].mxu0
      %v1844 = vadd.f32 %v1718, %v1843
      %v1845 = vpop.f32.mrb[0].mxu0
      %1846 = vmatprep.mubr.bf16.mxu0 0
      %1847 = vmatmul.mubr.bf16.gmra.mrb[0].mxu0 %v1742
      %v1848 = vpop.f32.mrb[0].mxu0
      %v1849 = vadd.f32 %v1718, %v1848
      %v1850 = vpop.f32.mrb[0].mxu0
      %v1851 = vpop.f32.mrb[0].mxu0
      %v1852 = vadd.f32 %v1718, %v1851
      %v1853 = vpop.f32.mrb[0].mxu0
      %1854 = vmatprep.mubr.bf16.mxu0 0
      %1855 = vmatmul.mubr.bf16.gmra.mrb[0].mxu0 %v1745
      %v1856 = vpop.f32.mrb[0].mxu0
      %v1857 = vadd.f32 %v1718, %v1856
      %v1858 = vpop.f32.mrb[0].mxu0
      %v1859 = vpop.f32.mrb[0].mxu0
      %v1860 = vadd.f32 %v1718, %v1859
      %v1861 = vpop.f32.mrb[0].mxu0
      %1862 = vmatprep.mubr.bf16.mxu0 0
      %1863 = vmatmul.mubr.bf16.gmra.mrb[0].mxu0 %v1748
      %v1864 = vpop.f32.mrb[0].mxu0
      %v1865 = vadd.f32 %v1718, %v1864
      %v1866 = vpop.f32.mrb[0].mxu0
      %v1867 = vpop.f32.mrb[0].mxu0
      %v1868 = vadd.f32 %v1718, %v1867
      %v1869 = vpop.f32.mrb[0].mxu0
      %1870 = vmatprep.mubr.bf16.mxu0 0
      %1871 = vmatmul.mubr.bf16.gmra.mrb[0].mxu0 %v1751
      %v1872 = vpop.f32.mrb[0].mxu0
      %v1873 = vadd.f32 %v1718, %v1872
      %v1874 = vpop.f32.mrb[0].mxu0
      %v1875 = vpop.f32.mrb[0].mxu0
      %v1876 = vadd.f32 %v1718, %v1875
      %v1877 = vpop.f32.mrb[0].mxu0
      %1878 = vmatprep.mubr.bf16.mxu0 0
      %1879 = vmatmul.mubr.bf16.gmra.mrb[0].mxu0 %v1754
      %v1880 = vpop.f32.mrb[0].mxu0
      %v1881 = vadd.f32 %v1718, %v1880
      %v1882 = vpop.f32.mrb[0].mxu0
      %v1883 = vpop.f32.mrb[0].mxu0
      %v1884 = vadd.f32 %v1718, %v1883
      %v1885 = vpop.f32.mrb[0].mxu0
      %1886 = vmatprep.mubr.bf16.mxu0 0
      %1887 = vmatmul.mubr.bf16.gmra.mrb[0].mxu0 %v1757
      %v1888 = vpop.f32.mrb[0].mxu0
      %v1889 = vadd.f32 %v1718, %v1888
      %v1890 = vpop.f32.mrb[0].mxu0
      %v1891 = vpop.f32.mrb[0].mxu0
      %v1892 = vadd.f32 %v1718, %v1891
      %v1893 = vpop.f32.mrb[0].mxu0
      %1894 = vmatprep.mubr.bf16.mxu0 0
      %1895 = vmatmul.mubr.bf16.gmra.mrb[0].mxu0 %v1760
      %v1896 = vpop.f32.mrb[0].mxu0
      %v1897 = vadd.f32 %v1718, %v1896
      %v1898 = vpop.f32.mrb[0].mxu0
      %v1899 = vpop.f32.mrb[0].mxu0
      %v1900 = vadd.f32 %v1718, %v1899
      %v1901 = vpop.f32.mrb[0].mxu0
      %1902 = vmatprep.mubr.bf16.mxu0 0
      %1903 = vmatmul.mubr.bf16.gmra.mrb[0].mxu0 %v1763
      %v1904 = vpop.f32.mrb[0].mxu0
      %v1905 = vadd.f32 %v1718, %v1904
      %v1906 = vpop.f32.mrb[0].mxu0
      %v1907 = vpop.f32.mrb[0].mxu0
      %v1908 = vadd.f32 %v1718, %v1907
      %v1909 = vpop.f32.mrb[0].mxu0
      %1910 = vmatprep.mubr.bf16.mxu0 0
      %1911 = vmatmul.mubr.bf16.gmra.mrb[0].mxu0 %v1766
      %v1912 = vpop.f32.mrb[0].mxu0
      %v1913 = vadd.f32 %v1718, %v1912
      %v1914 = vpop.f32.mrb[0].mxu0
      %v1915 = vpop.f32.mrb[0].mxu0
      %v1916 = vadd.f32 %v1718, %v1915
      %v1917 = vpop.f32.mrb[0].mxu0
      %1918 = vmatprep.mubr.bf16.mxu0 0
      %1919 = vmatmul.mubr.bf16.gmra.mrb[0].mxu0 %v1769
      %v1920 = vpop.f32.mrb[0].mxu0
      %v1921 = vadd.f32 %v1718, %v1920
      %v1922 = vpop.f32.mrb[0].mxu0
      %v1923 = vpop.f32.mrb[0].mxu0
      %v1924 = vadd.f32 %v1718, %v1923
      %v1925 = vpop.f32.mrb[0].mxu0
      %1926 = vmatprep.mubr.bf16.mxu0 0
      %1927 = vmatmul.mubr.bf16.gmra.mrb[0].mxu0 %v1772
      %v1928 = vpop.f32.mrb[0].mxu0
      %v1929 = vadd.f32 %v1718, %v1928
      %v1930 = vpop.f32.mrb[0].mxu0
      %v1931 = vpop.f32.mrb[0].mxu0
      %v1932 = vadd.f32 %v1718, %v1931
      %v1933 = vpop.f32.mrb[0].mxu0
      %1934 = vdwg.mxu0
      %v1935 = vadd.f32 %v1809, %v280
      %v1936 = vadd.f32 %v1812, %v281
      %v1937 = vadd.f32 %v1817, %v282
      %v1938 = vadd.f32 %v1820, %v283
      %v1939 = vadd.f32 %v1825, %v284
      %v1940 = vadd.f32 %v1828, %v285
      %v1941 = vadd.f32 %v1833, %v286
      %v1942 = vadd.f32 %v1836, %v287
      %v1943 = vadd.f32 %v1841, %v288
      %v1944 = vadd.f32 %v1844, %v289
      %v1945 = vadd.f32 %v1849, %v290
      %v1946 = vadd.f32 %v1852, %v291
      %v1947 = vadd.f32 %v1857, %v292
      %v1948 = vadd.f32 %v1860, %v293
      %v1949 = vadd.f32 %v1865, %v294
      %v1950 = vadd.f32 %v1868, %v295
      %v1951 = vadd.f32 %v1873, %v296
      %v1952 = vadd.f32 %v1876, %v297
      %v1953 = vadd.f32 %v1881, %v298
      %v1954 = vadd.f32 %v1884, %v299
      %v1955 = vadd.f32 %v1889, %v300
      %v1956 = vadd.f32 %v1892, %v301
      %v1957 = vadd.f32 %v1897, %v302
      %v1958 = vadd.f32 %v1900, %v303
      %v1959 = vadd.f32 %v1905, %v304
      %v1960 = vadd.f32 %v1908, %v305
      %v1961 = vadd.f32 %v1913, %v306
      %v1962 = vadd.f32 %v1916, %v307
      %v1963 = vadd.f32 %v1921, %v308
      %v1964 = vadd.f32 %v1924, %v309
      %v1965 = vadd.f32 %v1929, %v310
      %v1966 = vadd.f32 %v1932, %v311
      %1967 = vst.msk [vmem:[%s278] sm:$0xff] %vm336, %v1935
      %1968 = vst.msk [vmem:[%s278 + $0x8] sm:$0xff] %vm336, %v1936
      %1969 = vst.msk [vmem:[%s278 + $0x10] sm:$0xff] %vm336, %v1937
      %1970 = vst.msk [vmem:[%s278 + $0x18] sm:$0xff] %vm336, %v1938
      %1971 = vst.msk [vmem:[%s278 + $0x20] sm:$0xff] %vm336, %v1939
      %1972 = vst.msk [vmem:[%s278 + $0x28] sm:$0xff] %vm336, %v1940
      %1973 = vst.msk [vmem:[%s278 + $0x30] sm:$0xff] %vm336, %v1941
      %1974 = vst.msk [vmem:[%s278 + $0x38] sm:$0xff] %vm336, %v1942
      %1975 = vst.msk [vmem:[%s278 + $0x40] sm:$0xff] %vm336, %v1943
      %1976 = vst.msk [vmem:[%s278 + $0x48] sm:$0xff] %vm336, %v1944
      %1977 = vst.msk [vmem:[%s278 + $0x50] sm:$0xff] %vm336, %v1945
      %1978 = vst.msk [vmem:[%s278 + $0x58] sm:$0xff] %vm336, %v1946
      %1979 = vst.msk [vmem:[%s278 + $0x60] sm:$0xff] %vm336, %v1947
      %1980 = vst.msk [vmem:[%s278 + $0x68] sm:$0xff] %vm336, %v1948
      %1981 = vst.msk [vmem:[%s278 + $0x70] sm:$0xff] %vm336, %v1949
      %1982 = vst.msk [vmem:[%s278 + $0x78] sm:$0xff] %vm336, %v1950
      %1983 = vst.msk [vmem:[%s278 + $0x80] sm:$0xff] %vm336, %v1951
      %1984 = vst.msk [vmem:[%s278 + $0x88] sm:$0xff] %vm336, %v1952
      %1985 = vst.msk [vmem:[%s278 + $0x90] sm:$0xff] %vm336, %v1953
      %1986 = vst.msk [vmem:[%s278 + $0x98] sm:$0xff] %vm336, %v1954
      %1987 = vst.msk [vmem:[%s278 + $0xa0] sm:$0xff] %vm336, %v1955
      %1988 = vst.msk [vmem:[%s278 + $0xa8] sm:$0xff] %vm336, %v1956
      %1989 = vst.msk [vmem:[%s278 + $0xb0] sm:$0xff] %vm336, %v1957
      %1990 = vst.msk [vmem:[%s278 + $0xb8] sm:$0xff] %vm336, %v1958
      %1991 = vst.msk [vmem:[%s278 + $0xc0] sm:$0xff] %vm336, %v1959
      %1992 = vst.msk [vmem:[%s278 + $0xc8] sm:$0xff] %vm336, %v1960
      %1993 = vst.msk [vmem:[%s278 + $0xd0] sm:$0xff] %vm336, %v1961
      %1994 = vst.msk [vmem:[%s278 + $0xd8] sm:$0xff] %vm336, %v1962
      %1995 = vst.msk [vmem:[%s278 + $0xe0] sm:$0xff] %vm336, %v1963
      %1996 = vst.msk [vmem:[%s278 + $0xe8] sm:$0xff] %vm336, %v1964
      %1997 = vst.msk [vmem:[%s278 + $0xf0] sm:$0xff] %vm336, %v1965
      %1998 = vst.msk [vmem:[%s278 + $0xf8] sm:$0xff] %vm336, %v1966
      %p1999 = scmp.lt.s32.totalorder %s18, 1
      %s2000 = scalar_select %p1999, %s18, 1
      %s2001 = smul.addr %s2000, 32
      %s2002 = smul.addr %s2001, 8
      %s2003 = scalar_lea.vmem %s7, %s2002
      // Predicated region
      $region49: #{tpu_custom_call.1} parent=47 // pred_check
        %p2004 = pneg %p188
      $region50: #{tpu_custom_call.1} parent=47 // pred_check_branch
        %2006 = sbr.rel (%p2004) target = $region52
      $region51: #{tpu_custom_call.1} parent=47 // pred_region
        _
      $region52: #{tpu_custom_call.1} parent=47 // pred_fallthru
        _
    $region48: #{tpu_custom_call.1} parent=5 // pred_fallthru
      _
    %p2007 = scmp.le.s32.totalorder 2, %s13
    // Predicated region
    $region53: #{tpu_custom_call.1} parent=5 // pred_check
      %p2008 = pneg %p2007
    $region54: #{tpu_custom_call.1} parent=5 // pred_check_branch
      %2010 = sbr.rel (%p2008) target = $region56
    $region55: #{tpu_custom_call.1} parent=5 // pred_region
      %s2011 = ssub.s32 %s13, 2
      // Predicated region
      $region57: #{tpu_custom_call.1} parent=55 // pred_check
        %p2012 = pneg %p194
      $region58: #{tpu_custom_call.1} parent=55 // pred_check_branch
        %2014 = sbr.rel (%p2012) target = $region60
      $region59: #{tpu_custom_call.1} parent=55 // pred_region
        %p2015 = scmp.lt.s32.totalorder %s19, 1
        %s2016 = scalar_select %p2015, %s19, 1
        %s2017 = smul.addr %s2016, 32
        %s2018 = smul.addr %s2017, 8
        %s2019 = scalar_lea.vmem %s7, %s2018
      $region60: #{tpu_custom_call.1} parent=55 // pred_fallthru
        _
    $region56: #{tpu_custom_call.1} parent=5 // pred_fallthru
      _
  $region6: #{tpu_custom_call.1} parent=0 // loop_footer
    %s17 = sadd.s32 1, %s13
  $region7: #{tpu_custom_call.1} parent=0 // loop_footer_branch
    %12 = sbr.rel target = $region3
  $region8: #{tpu_custom_call.1} parent=0 // loop_exit
    _

</llo_original>
